<compile_context>
chip_gen: v7x
topology: tpu7x:2x2x1
jax: 0.10.0
libtpu: 0.0.40
codegen_flags: <defaults>
</compile_context>

<pallas_src>
import functools
import math

import jax
import jax.numpy as jnp
from jax import lax
from jax.experimental import pallas as pl
from jax.experimental.pallas import tpu as pltpu


def _silu(x):
    return x * (1.0 / (1.0 + jnp.exp(-x)))


def _softplus(x):
    # numerically stable softplus
    return jnp.maximum(x, 0.0) + jnp.log(1.0 + jnp.exp(-jnp.abs(x)))


def _rmsnorm(x, w, eps):
    var = jnp.mean(x * x, axis=-1, keepdims=True)
    return x * lax.rsqrt(var + eps) * w


# ----------------------------------------------------------------------------
# Device-aware tuning helpers
# ----------------------------------------------------------------------------
@functools.lru_cache(maxsize=1)
def _device_kind():
    try:
        return jax.devices()[0].device_kind.lower()
    except Exception:
        return ""


def _default_vmem_limit():
    k = _device_kind()
    if "v7" in k or "tpu7" in k:
        return 56 * 1024 * 1024          # v7x: 64 MiB physical per TC
    if "v5" in k or "v6" in k:
        return 100 * 1024 * 1024         # v5e/v6e: 128 MiB physical
    return None                          # unknown chip: keep compiler default


def _default_bf16_decay():
    k = _device_kind()
    # bf16 EUP exists on v6e/v7x; v5e (and older) keep the f32 path.
    return ("v6" in k) or ("v7" in k) or ("tpu7" in k)


def _choose_l_chunk(L, target):
    assert L % 8 == 0, "sequence length must be a multiple of 8"
    best = 8
    for c in range(8, min(L, target) + 1, 8):
        if L % c == 0:
            best = c
    return best


def _choose_stripe(d_inner, target=256):
    if d_inner <= 128:
        return d_inner
    best = None
    for c in range(128, min(d_inner, target) + 1, 128):
        if d_inner % c == 0:
            best = c
    return best if best is not None else d_inner


def _pick_l_chunk(L, d_model, d_inner, d_state, vmem_limit):
    k = _device_kind()
    target = 512 if ("v5" in k or "v6" in k) else 256
    budget = vmem_limit if vmem_limit is not None else 32 * 1024 * 1024

    def need(c):
        scr = ((c + 8) * d_inner + c * d_inner + d_state * d_inner
               + c * 2 * d_state) * 4                    # f32 scratch
        io = 2 * 2 * c * d_model * 2                     # dbl-buffered bf16 in/out blocks
        return scr + io

    Lc = _choose_l_chunk(L, target)
    while Lc > 8 and need(Lc) > budget // 2:             # leave half for weights
        new_Lc = _choose_l_chunk(L, max(8, Lc // 2))
        if new_Lc == Lc:
            break
        Lc = new_Lc
    return Lc


# ----------------------------------------------------------------------------
# Residual Mamba block kernel
# ----------------------------------------------------------------------------
def residual_mamba_block_kernel(
    # inputs
    x_ref,        # (1, Lc, d_model)                   residual-stream chunk (bf16)
    rms_w_ref,    # (1, d_model)                       RMSNorm weight
    in_wx_ref,    # (d_model, d_inner)        bf16     in_proj, x half
    in_wz_ref,    # (d_model, d_inner)        bf16     in_proj, z half
    conv_w_ref,   # (d_conv, d_inner)                  depthwise conv weight
    conv_b_ref,   # (1, d_inner)                       depthwise conv bias
    xdbl_w_ref,   # (d_inner, n_pad)          bf16     x_proj (dt|B|C, zero padded)
    dt_w_ref,     # (dt_rank, d_inner)        bf16     dt_proj weight
    dt_b_ref,     # (1, d_inner)                       dt_proj bias
    A_logT_ref,   # (d_state, d_inner)                 A_log (state dim on sublanes)
    D_ref,        # (1, d_inner)
    out_w_ref,    # (d_inner, d_model)        bf16     out_proj
    # output
    o_ref,        # (1, Lc, d_model)
    # scratch (persists across grid steps -> used as cross-chunk carries)
    xp_s,         # (Lc+8, d_inner) f32  rows 0..7: conv tail carry;
                  #                      rows 8..:  conv input xc, then silu(conv)
    h_s,          # (d_state, d_inner) f32  scan state carried across L-chunks
    dy_s,         # (Lc, d_inner) f32   delta, overwritten in place by scan output y
    bc_s,         # (Lc, 2*d_state) f32 [B | C]
    *, Lc, d_inner, d_conv, d_state, dt_rank, eps, d_stripe, bf16_decay,
):
    l = pl.program_id(1)

    @pl.when(l == 0)
    def _reset_carries():
        xp_s[0:8, :] = jnp.zeros((8, d_inner), jnp.float32)
        h_s[...] = jnp.zeros((d_state, d_inner), jnp.float32)

    # --- RMSNorm (pre-norm of the residual block) ---
    x_in = x_ref[0].astype(jnp.float32)                                    # (Lc, d_model)
    xn_b = _rmsnorm(x_in, rms_w_ref[...].astype(jnp.float32), eps).astype(jnp.bfloat16)

    # --- in_proj, x half only (z half deferred until the gate) ---
    xc = jnp.dot(xn_b, in_wx_ref[...], preferred_element_type=jnp.float32)  # (Lc, d_inner)

    # --- causal depthwise conv1d + SiLU ---
    # Staging buffer left-padded by 8 rows (sublane aligned); look-back slices
    # are read directly from the ref (no full-buffer temp).
    xp_s[8:, :] = xc
    acc = conv_b_ref[...] + xc * conv_w_ref[d_conv - 1:d_conv, :]           # look-back 0
    for j in range(1, d_conv):                                              # look-back j
        acc = acc + xp_s[8 - j:8 - j + Lc, :] * conv_w_ref[d_conv - 1 - j:d_conv - j, :]
    xs = _silu(acc)                                                         # (Lc, d_inner)
    xp_s[0:8, :] = xp_s[Lc:Lc + 8, :]      # carry conv tail (pre-activation) to next chunk
    xp_s[8:, :] = xs                       # reuse staging rows to hold silu(conv)

    # --- fused x_proj -> [dt_lowrank | B | C | pad]; dt_proj + softplus ---
    xdbl = jnp.dot(xs.astype(jnp.bfloat16), xdbl_w_ref[...],
                   preferred_element_type=jnp.float32)                      # (Lc, n_pad)
    dy_s[...] = _softplus(
        jnp.dot(xdbl[:, :dt_rank].astype(jnp.bfloat16), dt_w_ref[...],
                preferred_element_type=jnp.float32) + dt_b_ref[...])        # delta
    bc_s[...] = xdbl[:, dt_rank:dt_rank + 2 * d_state]

    # --- fused discretization + selective scan + C-contraction ---
    # Striped over d_inner lanes so the h stripe stays in vregs; 8 timesteps
    # (one sublane block) per fori iteration, statically unrolled.
    #   h_t = exp(delta_t*A) * h_{t-1} + (delta_t*x_t) ⊗ B_t ;  y_t = C_t · h_t
    dec_dtype = jnp.bfloat16 if bf16_decay else jnp.float32
    n_stripes = d_inner // d_stripe
    n_blocks = Lc // 8

    for s in range(n_stripes):
        c0 = s * d_stripe
        A_T = (-jnp.exp(A_logT_ref[:, c0:c0 + d_stripe])).astype(dec_dtype)  # (d_state, Dc)

        def blk_body(b, h, c0=c0, A_T=A_T):
            r0 = pl.multiple_of(b * 8, 8)
            r8 = pl.multiple_of(b * 8 + 8, 8)
            dlt = dy_s[pl.ds(r0, 8), pl.ds(c0, d_stripe)]                    # (8, Dc)
            xsb = xp_s[pl.ds(r8, 8), pl.ds(c0, d_stripe)]                    # (8, Dc)
            dx = dlt * xsb                                                   # delta * conv_out
            dlt_c = dlt.astype(dec_dtype)
            bcT = bc_s[pl.ds(r0, 8), :].T                                    # (2*d_state, 8)
            y_rows = []
            for i in range(8):                                               # static unroll
                a_t = jnp.exp(dlt_c[i:i + 1, :] * A_T).astype(jnp.float32)   # (d_state, Dc)
                bx_t = bcT[:d_state, i:i + 1] * dx[i:i + 1, :]               # (d_state, Dc)
                h = a_t * h + bx_t
                y_rows.append(jnp.sum(bcT[d_state:, i:i + 1] * h,
                                      axis=0, keepdims=True))                # (1, Dc)
            # y overwrites the (already consumed) delta rows of this stripe.
            dy_s[pl.ds(r0, 8), pl.ds(c0, d_stripe)] = jnp.concatenate(y_rows, axis=0)
            return h

        h0 = h_s[:, c0:c0 + d_stripe]
        h_s[:, c0:c0 + d_stripe] = lax.fori_loop(0, n_blocks, blk_body, h0)

    # --- D skip, SiLU(z) gate (deferred in_proj z half), out_proj, residual ---
    y = dy_s[...] + xp_s[8:, :] * D_ref[...]
    z = jnp.dot(xn_b, in_wz_ref[...], preferred_element_type=jnp.float32)
    y = y * _silu(z)
    out = jnp.dot(y.astype(jnp.bfloat16), out_w_ref[...],
                  preferred_element_type=jnp.float32)                        # (Lc, d_model)
    o_ref[0] = (out + x_ref[0].astype(jnp.float32)).astype(o_ref.dtype)


def residual_mamba_block(x, p, *, eps=1e-5, l_chunk=None, d_stripe_target=256,
                         vmem_limit_bytes=None, bf16_decay=None):
    B, L, d_model = x.shape
    d_inner = p["in_wx"].shape[1]
    d_conv = p["conv_w"].shape[0]
    d_state = p["A_logT"].shape[0]
    dt_rank = p["dt_w"].shape[0]

    if vmem_limit_bytes is None:
        vmem_limit_bytes = _default_vmem_limit()
    if bf16_decay is None:
        bf16_decay = _default_bf16_decay()

    Lc = l_chunk if l_chunk is not None else _pick_l_chunk(
        L, d_model, d_inner, d_state, vmem_limit_bytes)
    assert L % Lc == 0 and Lc % 8 == 0
    n_chunks = L // Lc

    d_stripe = _choose_stripe(d_inner, d_stripe_target)
    assert d_inner % d_stripe == 0

    params = [p["rms_w"], p["in_wx"], p["in_wz"], p["conv_w"], p["conv_b"],
              p["xdbl_w"], p["dt_w"], p["dt_b"], p["A_logT"], p["D"], p["out_w"]]

    def param_spec(a):
        return pl.BlockSpec(a.shape, lambda b, l: (0,) * a.ndim)

    kernel = functools.partial(
        residual_mamba_block_kernel,
        Lc=Lc, d_inner=d_inner, d_conv=d_conv, d_state=d_state,
        dt_rank=dt_rank, eps=eps, d_stripe=d_stripe, bf16_decay=bf16_decay)

    cp_kwargs = dict(dimension_semantics=("parallel", "arbitrary"))
    if vmem_limit_bytes is not None:
        cp_kwargs["vmem_limit_bytes"] = int(vmem_limit_bytes)

    return pl.pallas_call(
        kernel,
        out_shape=jax.ShapeDtypeStruct((B, L, d_model), x.dtype),
        grid=(B, n_chunks),
        in_specs=[pl.BlockSpec((1, Lc, d_model), lambda b, l: (b, l, 0))]
        + [param_spec(a) for a in params],
        out_specs=pl.BlockSpec((1, Lc, d_model), lambda b, l: (b, l, 0)),
        scratch_shapes=[
            pltpu.VMEM((Lc + 8, d_inner), jnp.float32),   # conv staging / tail / silu(conv)
            pltpu.VMEM((d_state, d_inner), jnp.float32),  # scan state carry
            pltpu.VMEM((Lc, d_inner), jnp.float32),       # delta, aliased by scan output y
            pltpu.VMEM((Lc, 2 * d_state), jnp.float32),   # [B | C]
        ],
        compiler_params=pltpu.CompilerParams(**cp_kwargs),
    )(x, *params)


# ----------------------------------------------------------------------------
# RMSNorm (final norm), tiled over L
# ----------------------------------------------------------------------------
def rmsnorm_kernel(x_ref, w_ref, o_ref, *, eps):
    x = x_ref[0].astype(jnp.float32)
    o_ref[0] = _rmsnorm(x, w_ref[...].astype(jnp.float32), eps).astype(o_ref.dtype)


def rmsnorm(x, w, *, eps=1e-5, out_dtype=None, l_chunk_target=512):
    B, L, d_model = x.shape
    if out_dtype is None:
        out_dtype = x.dtype
    Lr = _choose_l_chunk(L, l_chunk_target)
    return pl.pallas_call(
        functools.partial(rmsnorm_kernel, eps=eps),
        out_shape=jax.ShapeDtypeStruct((B, L, d_model), out_dtype),
        grid=(B, L // Lr),
        in_specs=[pl.BlockSpec((1, Lr, d_model), lambda b, l: (b, l, 0)),
                  pl.BlockSpec(w.shape, lambda b, l: (0, 0))],
        out_specs=pl.BlockSpec((1, Lr, d_model), lambda b, l: (b, l, 0)),
        compiler_params=pltpu.CompilerParams(
            dimension_semantics=("parallel", "parallel")),
    )(x, w)


# ----------------------------------------------------------------------------
# Backbone
# ----------------------------------------------------------------------------
def backbone_forward(input_ids, params, *, residual_dtype=jnp.bfloat16):
    # Embedding lookup is plain-JAX glue (gather); the heavy per-layer compute
    # runs inside the Pallas kernels above.  Residual stream is kept in bf16
    # to halve per-layer HBM traffic; in-kernel math is f32.
    x = jnp.take(params["embedding"], input_ids, axis=0).astype(residual_dtype)
    for layer in params["layers"]:
        x = residual_mamba_block(x, layer)
    return rmsnorm(x, params["norm_f"], out_dtype=jnp.float32)


def _round_up(x, m):
    return (x + m - 1) // m * m


def init_params(key, *, vocab_size, d_model, n_layer, d_conv=4, d_state=16,
                expand=2, pad_vocab_size_multiple=8):
    if vocab_size % pad_vocab_size_multiple != 0:
        vocab_size += pad_vocab_size_multiple - vocab_size % pad_vocab_size_multiple
    d_inner = int(expand * d_model)
    dt_rank = math.ceil(d_model / 16)
    n_xdbl = dt_rank + 2 * d_state
    n_xdbl_pad = _round_up(n_xdbl, 128)      # lane-dense x_proj output (zero pad)

    keys = iter(jax.random.split(key, 4 + 16 * n_layer))

    def nrm(shape, scale=0.02, dtype=jnp.float32):
        return (scale * jax.random.normal(next(keys), shape)).astype(dtype)

    # A_log exactly as in the module (log of [1..d_state] repeated over d_inner),
    # stored transposed so the state dim sits on sublanes inside the kernel.
    A_logT = jnp.log(jnp.broadcast_to(
        jnp.arange(1, d_state + 1, dtype=jnp.float32)[:, None],
        (d_state, d_inner)))

    layers = []
    for _ in range(n_layer):
        xdbl_w = jnp.zeros((d_inner, n_xdbl_pad), jnp.float32)
        xdbl_w = xdbl_w.at[:, :n_xdbl].set(nrm((d_inner, n_xdbl)))
        layers.append(dict(
            rms_w=jnp.ones((1, d_model), jnp.float32),
            in_wx=nrm((d_model, d_inner), dtype=jnp.bfloat16),      # in_proj (x half)
            in_wz=nrm((d_model, d_inner), dtype=jnp.bfloat16),      # in_proj (z half)
            conv_w=nrm((d_conv, d_inner), 0.1),
            conv_b=nrm((1, d_inner), 0.1),
            xdbl_w=xdbl_w.astype(jnp.bfloat16),                     # x_proj (dt|B|C|pad)
            dt_w=nrm((dt_rank, d_inner), 0.5, dtype=jnp.bfloat16),
            dt_b=nrm((1, d_inner), 0.1),
            A_logT=A_logT,
            D=jnp.ones((1, d_inner), jnp.float32),
            out_w=nrm((d_inner, d_model), dtype=jnp.bfloat16),
        ))

    params = dict(
        embedding=nrm((vocab_size, d_model), 1.0),
        layers=layers,
        norm_f=jnp.ones((1, d_model), jnp.float32),
    )
    return params, vocab_size


if __name__ == "__main__":
    key = jax.random.PRNGKey(0)
    pkey, ikey = jax.random.split(key)

    # d_model=32 -> d_inner=64, dt_rank=2; vocab padded 100 -> 104
    d_model, n_layer, vocab_size = 32, 2, 100
    B, L = 2, 8

    params, padded_vocab = init_params(
        pkey, vocab_size=vocab_size, d_model=d_model, n_layer=n_layer)
    input_ids = jax.random.randint(ikey, (B, L), 0, padded_vocab, dtype=jnp.int32)

    out = backbone_forward(input_ids, params)
    jax.block_until_ready(out)
    assert out.shape == (B, L, d_model) and out.dtype == jnp.float32
    print("KERNEL_OK")
</pallas_src>

<mosaic_0001>
module attributes {stable_mosaic.version = 11 : i64} {
  func.func @residual_mamba_block_kernel(%arg0: i32, %arg1: i32, %arg2: memref<1x8x32xbf16, #tpu.memory_space<vmem>>, %arg3: memref<1x32xf32, #tpu.memory_space<vmem>>, %arg4: memref<32x64xbf16, #tpu.memory_space<vmem>>, %arg5: memref<32x64xbf16, #tpu.memory_space<vmem>>, %arg6: memref<4x64xf32, #tpu.memory_space<vmem>>, %arg7: memref<1x64xf32, #tpu.memory_space<vmem>>, %arg8: memref<64x128xbf16, #tpu.memory_space<vmem>>, %arg9: memref<2x64xbf16, #tpu.memory_space<vmem>>, %arg10: memref<1x64xf32, #tpu.memory_space<vmem>>, %arg11: memref<16x64xf32, #tpu.memory_space<vmem>>, %arg12: memref<1x64xf32, #tpu.memory_space<vmem>>, %arg13: memref<64x32xbf16, #tpu.memory_space<vmem>>, %arg14: memref<1x8x32xbf16, #tpu.memory_space<vmem>>, %arg15: memref<16x64xf32, #tpu.memory_space<vmem>>, %arg16: memref<16x64xf32, #tpu.memory_space<vmem>>, %arg17: memref<8x64xf32, #tpu.memory_space<vmem>>, %arg18: memref<8x32xf32, #tpu.memory_space<vmem>>) attributes {dimension_semantics = [#tpu.dimension_semantics<parallel>, #tpu.dimension_semantics<arbitrary>], iteration_bounds = array<i64: 2, 1>, scalar_prefetch = 0 : i64, scratch_operands = 4 : i64, tpu.core_type = #tpu.core_type<tc>, window_params = [{transform_indices = @transform_0, window_bounds = array<i64: 1, 8, 32>}, {pipeline_mode = #tpu.pipeline_mode<synchronous>, transform_indices = @transform_1, window_bounds = array<i64: 1, 32>}, {pipeline_mode = #tpu.pipeline_mode<synchronous>, transform_indices = @transform_2, window_bounds = array<i64: 32, 64>}, {pipeline_mode = #tpu.pipeline_mode<synchronous>, transform_indices = @transform_3, window_bounds = array<i64: 32, 64>}, {pipeline_mode = #tpu.pipeline_mode<synchronous>, transform_indices = @transform_4, window_bounds = array<i64: 4, 64>}, {pipeline_mode = #tpu.pipeline_mode<synchronous>, transform_indices = @transform_5, window_bounds = array<i64: 1, 64>}, {pipeline_mode = #tpu.pipeline_mode<synchronous>, transform_indices = @transform_6, window_bounds = array<i64: 64, 128>}, {pipeline_mode = #tpu.pipeline_mode<synchronous>, transform_indices = @transform_7, window_bounds = array<i64: 2, 64>}, {pipeline_mode = #tpu.pipeline_mode<synchronous>, transform_indices = @transform_8, window_bounds = array<i64: 1, 64>}, {pipeline_mode = #tpu.pipeline_mode<synchronous>, transform_indices = @transform_9, window_bounds = array<i64: 16, 64>}, {pipeline_mode = #tpu.pipeline_mode<synchronous>, transform_indices = @transform_10, window_bounds = array<i64: 1, 64>}, {pipeline_mode = #tpu.pipeline_mode<synchronous>, transform_indices = @transform_11, window_bounds = array<i64: 64, 32>}, {transform_indices = @transform_12, window_bounds = array<i64: 1, 8, 32>}]} {
    %c0_i32 = arith.constant 0 : i32
    %0 = arith.cmpi eq, %arg1, %c0_i32 : i32
    %1 = arith.extui %0 : i1 to i32
    %c0_i32_0 = arith.constant 0 : i32
    %2 = arith.cmpi ne, %1, %c0_i32_0 : i32
    scf.if %2 {
      %cst_88 = arith.constant 0.000000e+00 : f32
      %256 = vector.broadcast %cst_88 : f32 to vector<8x64xf32>
      %c0_89 = arith.constant 0 : index
      %c0_90 = arith.constant 0 : index
      %257 = vector.load %arg15[%c0_89, %c0_90] : memref<16x64xf32, #tpu.memory_space<vmem>>, vector<8x64xf32>
      tpu.vector_store %arg15[%c0_89, %c0_90], %256 {strides = array<i32>} : memref<16x64xf32, #tpu.memory_space<vmem>>, vector<8x64xf32>,
      %cst_91 = arith.constant 0.000000e+00 : f32
      %258 = vector.broadcast %cst_91 : f32 to vector<16x64xf32>
      %c0_92 = arith.constant 0 : index
      %c0_93 = arith.constant 0 : index
      %259 = vector.load %arg16[%c0_92, %c0_93] : memref<16x64xf32, #tpu.memory_space<vmem>>, vector<16x64xf32>
      tpu.vector_store %arg16[%c0_92, %c0_93], %258 {strides = array<i32>} : memref<16x64xf32, #tpu.memory_space<vmem>>, vector<16x64xf32>,
    } else {
    }
    %c0 = arith.constant 0 : index
    %c0_1 = arith.constant 0 : index
    %c0_2 = arith.constant 0 : index
    %3 = vector.load %arg2[%c0, %c0_1, %c0_2] : memref<1x8x32xbf16, #tpu.memory_space<vmem>>, vector<1x8x32xbf16>
    %4 = vector.shape_cast %3 : vector<1x8x32xbf16> to vector<8x32xbf16>
    %5 = arith.extf %4 : vector<8x32xbf16> to vector<8x32xf32>
    %c0_3 = arith.constant 0 : index
    %c0_4 = arith.constant 0 : index
    %6 = vector.load %arg3[%c0_3, %c0_4] : memref<1x32xf32, #tpu.memory_space<vmem>>, vector<1x32xf32>
    %7 = arith.mulf %5, %5 : vector<8x32xf32>
    %cst = arith.constant dense<0.000000e+00> : vector<8xf32>
    %8 = vector.multi_reduction <add>, %7, %cst [1] : vector<8x32xf32> to vector<8xf32>
    %9 = vector.shape_cast %8 : vector<8xf32> to vector<8x1xf32>
    %cst_5 = arith.constant 3.200000e+01 : f32
    %10 = vector.broadcast %cst_5 : f32 to vector<8x1xf32>
    %11 = arith.divf %9, %10 : vector<8x1xf32>
    %cst_6 = arith.constant 9.99999974E-6 : f32
    %12 = vector.broadcast %cst_6 : f32 to vector<8x1xf32>
    %13 = arith.addf %11, %12 : vector<8x1xf32>
    %14 = math.rsqrt %13 : vector<8x1xf32>
    %15 = vector.broadcast %14 : vector<8x1xf32> to vector<8x32xf32>
    %16 = arith.mulf %5, %15 : vector<8x32xf32>
    %17 = vector.broadcast %6 : vector<1x32xf32> to vector<8x32xf32>
    %18 = arith.mulf %16, %17 : vector<8x32xf32>
    %19 = arith.truncf %18 : vector<8x32xf32> to vector<8x32xbf16>
    %c0_7 = arith.constant 0 : index
    %c0_8 = arith.constant 0 : index
    %20 = vector.load %arg4[%c0_7, %c0_8] : memref<32x64xbf16, #tpu.memory_space<vmem>>, vector<32x64xbf16>
    %cst_9 = arith.constant dense<0.000000e+00> : vector<8x64xf32>
    %21 = tpu.matmul %19, %20, %cst_9 {dimension_numbers = #tpu.dot_dimension_numbers<[1], [0], [0], [1], [0, 0, 1, 1], [], []>} : vector<8x32xbf16>, vector<32x64xbf16>, vector<8x64xf32> -> vector<8x64xf32>
    %c8 = arith.constant 8 : index
    %c0_10 = arith.constant 0 : index
    %22 = vector.load %arg15[%c8, %c0_10] : memref<16x64xf32, #tpu.memory_space<vmem>>, vector<8x64xf32>
    tpu.vector_store %arg15[%c8, %c0_10], %21 {strides = array<i32>} : memref<16x64xf32, #tpu.memory_space<vmem>>, vector<8x64xf32>,
    %c0_11 = arith.constant 0 : index
    %c0_12 = arith.constant 0 : index
    %23 = vector.load %arg7[%c0_11, %c0_12] : memref<1x64xf32, #tpu.memory_space<vmem>>, vector<1x64xf32>
    %c3 = arith.constant 3 : index
    %c0_13 = arith.constant 0 : index
    %24 = vector.load %arg6[%c3, %c0_13] : memref<4x64xf32, #tpu.memory_space<vmem>>, vector<1x64xf32>
    %25 = vector.broadcast %24 : vector<1x64xf32> to vector<8x64xf32>
    %26 = arith.mulf %21, %25 : vector<8x64xf32>
    %27 = vector.broadcast %23 : vector<1x64xf32> to vector<8x64xf32>
    %28 = arith.addf %27, %26 : vector<8x64xf32>
    %c7 = arith.constant 7 : index
    %c0_14 = arith.constant 0 : index
    %29 = vector.load %arg15[%c7, %c0_14] : memref<16x64xf32, #tpu.memory_space<vmem>>, vector<8x64xf32>
    %c2 = arith.constant 2 : index
    %c0_15 = arith.constant 0 : index
    %30 = vector.load %arg6[%c2, %c0_15] : memref<4x64xf32, #tpu.memory_space<vmem>>, vector<1x64xf32>
    %31 = vector.broadcast %30 : vector<1x64xf32> to vector<8x64xf32>
    %32 = arith.mulf %29, %31 : vector<8x64xf32>
    %33 = arith.addf %28, %32 : vector<8x64xf32>
    %c6 = arith.constant 6 : index
    %c0_16 = arith.constant 0 : index
    %34 = vector.load %arg15[%c6, %c0_16] : memref<16x64xf32, #tpu.memory_space<vmem>>, vector<8x64xf32>
    %c1 = arith.constant 1 : index
    %c0_17 = arith.constant 0 : index
    %35 = vector.load %arg6[%c1, %c0_17] : memref<4x64xf32, #tpu.memory_space<vmem>>, vector<1x64xf32>
    %36 = vector.broadcast %35 : vector<1x64xf32> to vector<8x64xf32>
    %37 = arith.mulf %34, %36 : vector<8x64xf32>
    %38 = arith.addf %33, %37 : vector<8x64xf32>
    %c5 = arith.constant 5 : index
    %c0_18 = arith.constant 0 : index
    %39 = vector.load %arg15[%c5, %c0_18] : memref<16x64xf32, #tpu.memory_space<vmem>>, vector<8x64xf32>
    %c0_19 = arith.constant 0 : index
    %c0_20 = arith.constant 0 : index
    %40 = vector.load %arg6[%c0_19, %c0_20] : memref<4x64xf32, #tpu.memory_space<vmem>>, vector<1x64xf32>
    %41 = vector.broadcast %40 : vector<1x64xf32> to vector<8x64xf32>
    %42 = arith.mulf %39, %41 : vector<8x64xf32>
    %43 = arith.addf %38, %42 : vector<8x64xf32>
    %cst_21 = arith.constant 0.000000e+00 : f32
    %44 = vector.broadcast %cst_21 : f32 to vector<8x64xf32>
    %45 = arith.subf %44, %43 : vector<8x64xf32>
    %46 = math.exp %45 : vector<8x64xf32>
    %cst_22 = arith.constant 1.000000e+00 : f32
    %47 = vector.broadcast %cst_22 : f32 to vector<8x64xf32>
    %48 = arith.addf %47, %46 : vector<8x64xf32>
    %cst_23 = arith.constant 1.000000e+00 : f32
    %49 = vector.broadcast %cst_23 : f32 to vector<8x64xf32>
    %50 = arith.divf %49, %48 : vector<8x64xf32>
    %51 = arith.mulf %43, %50 : vector<8x64xf32>
    %c8_24 = arith.constant 8 : index
    %c0_25 = arith.constant 0 : index
    %52 = vector.load %arg15[%c8_24, %c0_25] : memref<16x64xf32, #tpu.memory_space<vmem>>, vector<8x64xf32>
    %c0_26 = arith.constant 0 : index
    %c0_27 = arith.constant 0 : index
    %53 = vector.load %arg15[%c0_26, %c0_27] : memref<16x64xf32, #tpu.memory_space<vmem>>, vector<8x64xf32>
    tpu.vector_store %arg15[%c0_26, %c0_27], %52 {strides = array<i32>} : memref<16x64xf32, #tpu.memory_space<vmem>>, vector<8x64xf32>,
    %c8_28 = arith.constant 8 : index
    %c0_29 = arith.constant 0 : index
    %54 = vector.load %arg15[%c8_28, %c0_29] : memref<16x64xf32, #tpu.memory_space<vmem>>, vector<8x64xf32>
    tpu.vector_store %arg15[%c8_28, %c0_29], %51 {strides = array<i32>} : memref<16x64xf32, #tpu.memory_space<vmem>>, vector<8x64xf32>,
    %55 = arith.truncf %51 : vector<8x64xf32> to vector<8x64xbf16>
    %c0_30 = arith.constant 0 : index
    %c0_31 = arith.constant 0 : index
    %56 = vector.load %arg8[%c0_30, %c0_31] : memref<64x128xbf16, #tpu.memory_space<vmem>>, vector<64x128xbf16>
    %cst_32 = arith.constant dense<0.000000e+00> : vector<8x128xf32>
    %57 = tpu.matmul %55, %56, %cst_32 {dimension_numbers = #tpu.dot_dimension_numbers<[1], [0], [0], [1], [0, 0, 1, 1], [], []>} : vector<8x64xbf16>, vector<64x128xbf16>, vector<8x128xf32> -> vector<8x128xf32>
    %58 = vector.extract_strided_slice %57 {offsets = [0, 0], sizes = [8, 2], strides = [1, 1]} : vector<8x128xf32> to vector<8x2xf32>
    %59 = arith.truncf %58 : vector<8x2xf32> to vector<8x2xbf16>
    %c0_33 = arith.constant 0 : index
    %c0_34 = arith.constant 0 : index
    %60 = vector.load %arg9[%c0_33, %c0_34] : memref<2x64xbf16, #tpu.memory_space<vmem>>, vector<2x64xbf16>
    %cst_35 = arith.constant dense<0.000000e+00> : vector<8x64xf32>
    %61 = tpu.matmul %59, %60, %cst_35 {dimension_numbers = #tpu.dot_dimension_numbers<[1], [0], [0], [1], [0, 0, 1, 1], [], []>} : vector<8x2xbf16>, vector<2x64xbf16>, vector<8x64xf32> -> vector<8x64xf32>
    %c0_36 = arith.constant 0 : index
    %c0_37 = arith.constant 0 : index
    %62 = vector.load %arg10[%c0_36, %c0_37] : memref<1x64xf32, #tpu.memory_space<vmem>>, vector<1x64xf32>
    %63 = vector.broadcast %62 : vector<1x64xf32> to vector<8x64xf32>
    %64 = arith.addf %61, %63 : vector<8x64xf32>
    %cst_38 = arith.constant 0.000000e+00 : f32
    %65 = vector.broadcast %cst_38 : f32 to vector<8x64xf32>
    %66 = arith.maximumf %64, %65 : vector<8x64xf32>
    %67 = math.absf %64 : vector<8x64xf32>
    %cst_39 = arith.constant 0.000000e+00 : f32
    %68 = vector.broadcast %cst_39 : f32 to vector<8x64xf32>
    %69 = arith.subf %68, %67 : vector<8x64xf32>
    %70 = math.exp %69 : vector<8x64xf32>
    %cst_40 = arith.constant 1.000000e+00 : f32
    %71 = vector.broadcast %cst_40 : f32 to vector<8x64xf32>
    %72 = arith.addf %71, %70 : vector<8x64xf32>
    %73 = math.log %72 : vector<8x64xf32>
    %74 = arith.addf %66, %73 : vector<8x64xf32>
    %c0_41 = arith.constant 0 : index
    %c0_42 = arith.constant 0 : index
    %75 = vector.load %arg17[%c0_41, %c0_42] : memref<8x64xf32, #tpu.memory_space<vmem>>, vector<8x64xf32>
    tpu.vector_store %arg17[%c0_41, %c0_42], %74 {strides = array<i32>} : memref<8x64xf32, #tpu.memory_space<vmem>>, vector<8x64xf32>,
    %76 = vector.extract_strided_slice %57 {offsets = [0, 2], sizes = [8, 32], strides = [1, 1]} : vector<8x128xf32> to vector<8x32xf32>
    %c0_43 = arith.constant 0 : index
    %c0_44 = arith.constant 0 : index
    %77 = vector.load %arg18[%c0_43, %c0_44] : memref<8x32xf32, #tpu.memory_space<vmem>>, vector<8x32xf32>
    tpu.vector_store %arg18[%c0_43, %c0_44], %76 {strides = array<i32>} : memref<8x32xf32, #tpu.memory_space<vmem>>, vector<8x32xf32>,
    %c0_45 = arith.constant 0 : index
    %c0_46 = arith.constant 0 : index
    %78 = vector.load %arg11[%c0_45, %c0_46] : memref<16x64xf32, #tpu.memory_space<vmem>>, vector<16x64xf32>
    %79 = math.exp %78 : vector<16x64xf32>
    %cst_47 = arith.constant 0.000000e+00 : f32
    %80 = vector.broadcast %cst_47 : f32 to vector<16x64xf32>
    %81 = arith.subf %80, %79 : vector<16x64xf32>
    %c0_48 = arith.constant 0 : index
    %c0_49 = arith.constant 0 : index
    %82 = vector.load %arg16[%c0_48, %c0_49] : memref<16x64xf32, #tpu.memory_space<vmem>>, vector<16x64xf32>
    %c0_i32_50 = arith.constant 0 : i32
    %c8_i32 = arith.constant 8 : i32
    %83 = arith.muli %c0_i32_50, %c8_i32 : i32
    %84 = tpu.assume_multiple %83, 8 : i32
    %c8_i32_51 = arith.constant 8 : i32
    %85 = arith.muli %c0_i32_50, %c8_i32_51 : i32
    %c8_i32_52 = arith.constant 8 : i32
    %86 = arith.addi %85, %c8_i32_52 : i32
    %87 = tpu.assume_multiple %86, 8 : i32
    %88 = arith.index_cast %84 : i32 to index
    %c0_53 = arith.constant 0 : index
    %89 = vector.load %arg17[%88, %c0_53] : memref<8x64xf32, #tpu.memory_space<vmem>>, vector<8x64xf32>
    %90 = arith.index_cast %87 : i32 to index
    %c0_54 = arith.constant 0 : index
    %91 = vector.load %arg15[%90, %c0_54] : memref<16x64xf32, #tpu.memory_space<vmem>>, vector<8x64xf32>
    %92 = arith.mulf %89, %91 : vector<8x64xf32>
    %93 = arith.index_cast %84 : i32 to index
    %c0_55 = arith.constant 0 : index
    %94 = vector.load %arg18[%93, %c0_55] : memref<8x32xf32, #tpu.memory_space<vmem>>, vector<8x32xf32>
    %95 = tpu.transpose %94, [1, 0] : vector<8x32xf32> -> vector<32x8xf32>
    %96 = vector.extract_strided_slice %89 {offsets = [0, 0], sizes = [1, 64], strides = [1, 1]} : vector<8x64xf32> to vector<1x64xf32>
    %97 = vector.broadcast %96 : vector<1x64xf32> to vector<16x64xf32>
    %98 = arith.mulf %97, %81 : vector<16x64xf32>
    %99 = math.exp %98 : vector<16x64xf32>
    %100 = vector.extract_strided_slice %95 {offsets = [0, 0], sizes = [16, 1], strides = [1, 1]} : vector<32x8xf32> to vector<16x1xf32>
    %101 = vector.extract_strided_slice %92 {offsets = [0, 0], sizes = [1, 64], strides = [1, 1]} : vector<8x64xf32> to vector<1x64xf32>
    %102 = vector.broadcast %100 : vector<16x1xf32> to vector<16x64xf32>
    %103 = vector.broadcast %101 : vector<1x64xf32> to vector<16x64xf32>
    %104 = arith.mulf %102, %103 : vector<16x64xf32>
    %105 = arith.mulf %99, %82 : vector<16x64xf32>
    %106 = arith.addf %105, %104 : vector<16x64xf32>
    %107 = vector.extract_strided_slice %95 {offsets = [16, 0], sizes = [16, 1], strides = [1, 1]} : vector<32x8xf32> to vector<16x1xf32>
    %108 = vector.broadcast %107 : vector<16x1xf32> to vector<16x64xf32>
    %109 = arith.mulf %108, %106 : vector<16x64xf32>
    %cst_56 = arith.constant dense<0.000000e+00> : vector<64xf32>
    %110 = vector.multi_reduction <add>, %109, %cst_56 [0] : vector<16x64xf32> to vector<64xf32>
    %111 = vector.shape_cast %110 : vector<64xf32> to vector<1x64xf32>
    %112 = vector.extract_strided_slice %89 {offsets = [1, 0], sizes = [1, 64], strides = [1, 1]} : vector<8x64xf32> to vector<1x64xf32>
    %113 = vector.broadcast %112 : vector<1x64xf32> to vector<16x64xf32>
    %114 = arith.mulf %113, %81 : vector<16x64xf32>
    %115 = math.exp %114 : vector<16x64xf32>
    %116 = vector.extract_strided_slice %95 {offsets = [0, 1], sizes = [16, 1], strides = [1, 1]} : vector<32x8xf32> to vector<16x1xf32>
    %117 = vector.extract_strided_slice %92 {offsets = [1, 0], sizes = [1, 64], strides = [1, 1]} : vector<8x64xf32> to vector<1x64xf32>
    %118 = vector.broadcast %116 : vector<16x1xf32> to vector<16x64xf32>
    %119 = vector.broadcast %117 : vector<1x64xf32> to vector<16x64xf32>
    %120 = arith.mulf %118, %119 : vector<16x64xf32>
    %121 = arith.mulf %115, %106 : vector<16x64xf32>
    %122 = arith.addf %121, %120 : vector<16x64xf32>
    %123 = vector.extract_strided_slice %95 {offsets = [16, 1], sizes = [16, 1], strides = [1, 1]} : vector<32x8xf32> to vector<16x1xf32>
    %124 = vector.broadcast %123 : vector<16x1xf32> to vector<16x64xf32>
    %125 = arith.mulf %124, %122 : vector<16x64xf32>
    %cst_57 = arith.constant dense<0.000000e+00> : vector<64xf32>
    %126 = vector.multi_reduction <add>, %125, %cst_57 [0] : vector<16x64xf32> to vector<64xf32>
    %127 = vector.shape_cast %126 : vector<64xf32> to vector<1x64xf32>
    %128 = vector.extract_strided_slice %89 {offsets = [2, 0], sizes = [1, 64], strides = [1, 1]} : vector<8x64xf32> to vector<1x64xf32>
    %129 = vector.broadcast %128 : vector<1x64xf32> to vector<16x64xf32>
    %130 = arith.mulf %129, %81 : vector<16x64xf32>
    %131 = math.exp %130 : vector<16x64xf32>
    %132 = vector.extract_strided_slice %95 {offsets = [0, 2], sizes = [16, 1], strides = [1, 1]} : vector<32x8xf32> to vector<16x1xf32>
    %133 = vector.extract_strided_slice %92 {offsets = [2, 0], sizes = [1, 64], strides = [1, 1]} : vector<8x64xf32> to vector<1x64xf32>
    %134 = vector.broadcast %132 : vector<16x1xf32> to vector<16x64xf32>
    %135 = vector.broadcast %133 : vector<1x64xf32> to vector<16x64xf32>
    %136 = arith.mulf %134, %135 : vector<16x64xf32>
    %137 = arith.mulf %131, %122 : vector<16x64xf32>
    %138 = arith.addf %137, %136 : vector<16x64xf32>
    %139 = vector.extract_strided_slice %95 {offsets = [16, 2], sizes = [16, 1], strides = [1, 1]} : vector<32x8xf32> to vector<16x1xf32>
    %140 = vector.broadcast %139 : vector<16x1xf32> to vector<16x64xf32>
    %141 = arith.mulf %140, %138 : vector<16x64xf32>
    %cst_58 = arith.constant dense<0.000000e+00> : vector<64xf32>
    %142 = vector.multi_reduction <add>, %141, %cst_58 [0] : vector<16x64xf32> to vector<64xf32>
    %143 = vector.shape_cast %142 : vector<64xf32> to vector<1x64xf32>
    %144 = vector.extract_strided_slice %89 {offsets = [3, 0], sizes = [1, 64], strides = [1, 1]} : vector<8x64xf32> to vector<1x64xf32>
    %145 = vector.broadcast %144 : vector<1x64xf32> to vector<16x64xf32>
    %146 = arith.mulf %145, %81 : vector<16x64xf32>
    %147 = math.exp %146 : vector<16x64xf32>
    %148 = vector.extract_strided_slice %95 {offsets = [0, 3], sizes = [16, 1], strides = [1, 1]} : vector<32x8xf32> to vector<16x1xf32>
    %149 = vector.extract_strided_slice %92 {offsets = [3, 0], sizes = [1, 64], strides = [1, 1]} : vector<8x64xf32> to vector<1x64xf32>
    %150 = vector.broadcast %148 : vector<16x1xf32> to vector<16x64xf32>
    %151 = vector.broadcast %149 : vector<1x64xf32> to vector<16x64xf32>
    %152 = arith.mulf %150, %151 : vector<16x64xf32>
    %153 = arith.mulf %147, %138 : vector<16x64xf32>
    %154 = arith.addf %153, %152 : vector<16x64xf32>
    %155 = vector.extract_strided_slice %95 {offsets = [16, 3], sizes = [16, 1], strides = [1, 1]} : vector<32x8xf32> to vector<16x1xf32>
    %156 = vector.broadcast %155 : vector<16x1xf32> to vector<16x64xf32>
    %157 = arith.mulf %156, %154 : vector<16x64xf32>
    %cst_59 = arith.constant dense<0.000000e+00> : vector<64xf32>
    %158 = vector.multi_reduction <add>, %157, %cst_59 [0] : vector<16x64xf32> to vector<64xf32>
    %159 = vector.shape_cast %158 : vector<64xf32> to vector<1x64xf32>
    %160 = vector.extract_strided_slice %89 {offsets = [4, 0], sizes = [1, 64], strides = [1, 1]} : vector<8x64xf32> to vector<1x64xf32>
    %161 = vector.broadcast %160 : vector<1x64xf32> to vector<16x64xf32>
    %162 = arith.mulf %161, %81 : vector<16x64xf32>
    %163 = math.exp %162 : vector<16x64xf32>
    %164 = vector.extract_strided_slice %95 {offsets = [0, 4], sizes = [16, 1], strides = [1, 1]} : vector<32x8xf32> to vector<16x1xf32>
    %165 = vector.extract_strided_slice %92 {offsets = [4, 0], sizes = [1, 64], strides = [1, 1]} : vector<8x64xf32> to vector<1x64xf32>
    %166 = vector.broadcast %164 : vector<16x1xf32> to vector<16x64xf32>
    %167 = vector.broadcast %165 : vector<1x64xf32> to vector<16x64xf32>
    %168 = arith.mulf %166, %167 : vector<16x64xf32>
    %169 = arith.mulf %163, %154 : vector<16x64xf32>
    %170 = arith.addf %169, %168 : vector<16x64xf32>
    %171 = vector.extract_strided_slice %95 {offsets = [16, 4], sizes = [16, 1], strides = [1, 1]} : vector<32x8xf32> to vector<16x1xf32>
    %172 = vector.broadcast %171 : vector<16x1xf32> to vector<16x64xf32>
    %173 = arith.mulf %172, %170 : vector<16x64xf32>
    %cst_60 = arith.constant dense<0.000000e+00> : vector<64xf32>
    %174 = vector.multi_reduction <add>, %173, %cst_60 [0] : vector<16x64xf32> to vector<64xf32>
    %175 = vector.shape_cast %174 : vector<64xf32> to vector<1x64xf32>
    %176 = vector.extract_strided_slice %89 {offsets = [5, 0], sizes = [1, 64], strides = [1, 1]} : vector<8x64xf32> to vector<1x64xf32>
    %177 = vector.broadcast %176 : vector<1x64xf32> to vector<16x64xf32>
    %178 = arith.mulf %177, %81 : vector<16x64xf32>
    %179 = math.exp %178 : vector<16x64xf32>
    %180 = vector.extract_strided_slice %95 {offsets = [0, 5], sizes = [16, 1], strides = [1, 1]} : vector<32x8xf32> to vector<16x1xf32>
    %181 = vector.extract_strided_slice %92 {offsets = [5, 0], sizes = [1, 64], strides = [1, 1]} : vector<8x64xf32> to vector<1x64xf32>
    %182 = vector.broadcast %180 : vector<16x1xf32> to vector<16x64xf32>
    %183 = vector.broadcast %181 : vector<1x64xf32> to vector<16x64xf32>
    %184 = arith.mulf %182, %183 : vector<16x64xf32>
    %185 = arith.mulf %179, %170 : vector<16x64xf32>
    %186 = arith.addf %185, %184 : vector<16x64xf32>
    %187 = vector.extract_strided_slice %95 {offsets = [16, 5], sizes = [16, 1], strides = [1, 1]} : vector<32x8xf32> to vector<16x1xf32>
    %188 = vector.broadcast %187 : vector<16x1xf32> to vector<16x64xf32>
    %189 = arith.mulf %188, %186 : vector<16x64xf32>
    %cst_61 = arith.constant dense<0.000000e+00> : vector<64xf32>
    %190 = vector.multi_reduction <add>, %189, %cst_61 [0] : vector<16x64xf32> to vector<64xf32>
    %191 = vector.shape_cast %190 : vector<64xf32> to vector<1x64xf32>
    %192 = vector.extract_strided_slice %89 {offsets = [6, 0], sizes = [1, 64], strides = [1, 1]} : vector<8x64xf32> to vector<1x64xf32>
    %193 = vector.broadcast %192 : vector<1x64xf32> to vector<16x64xf32>
    %194 = arith.mulf %193, %81 : vector<16x64xf32>
    %195 = math.exp %194 : vector<16x64xf32>
    %196 = vector.extract_strided_slice %95 {offsets = [0, 6], sizes = [16, 1], strides = [1, 1]} : vector<32x8xf32> to vector<16x1xf32>
    %197 = vector.extract_strided_slice %92 {offsets = [6, 0], sizes = [1, 64], strides = [1, 1]} : vector<8x64xf32> to vector<1x64xf32>
    %198 = vector.broadcast %196 : vector<16x1xf32> to vector<16x64xf32>
    %199 = vector.broadcast %197 : vector<1x64xf32> to vector<16x64xf32>
    %200 = arith.mulf %198, %199 : vector<16x64xf32>
    %201 = arith.mulf %195, %186 : vector<16x64xf32>
    %202 = arith.addf %201, %200 : vector<16x64xf32>
    %203 = vector.extract_strided_slice %95 {offsets = [16, 6], sizes = [16, 1], strides = [1, 1]} : vector<32x8xf32> to vector<16x1xf32>
    %204 = vector.broadcast %203 : vector<16x1xf32> to vector<16x64xf32>
    %205 = arith.mulf %204, %202 : vector<16x64xf32>
    %cst_62 = arith.constant dense<0.000000e+00> : vector<64xf32>
    %206 = vector.multi_reduction <add>, %205, %cst_62 [0] : vector<16x64xf32> to vector<64xf32>
    %207 = vector.shape_cast %206 : vector<64xf32> to vector<1x64xf32>
    %208 = vector.extract_strided_slice %89 {offsets = [7, 0], sizes = [1, 64], strides = [1, 1]} : vector<8x64xf32> to vector<1x64xf32>
    %209 = vector.broadcast %208 : vector<1x64xf32> to vector<16x64xf32>
    %210 = arith.mulf %209, %81 : vector<16x64xf32>
    %211 = math.exp %210 : vector<16x64xf32>
    %212 = vector.extract_strided_slice %95 {offsets = [0, 7], sizes = [16, 1], strides = [1, 1]} : vector<32x8xf32> to vector<16x1xf32>
    %213 = vector.extract_strided_slice %92 {offsets = [7, 0], sizes = [1, 64], strides = [1, 1]} : vector<8x64xf32> to vector<1x64xf32>
    %214 = vector.broadcast %212 : vector<16x1xf32> to vector<16x64xf32>
    %215 = vector.broadcast %213 : vector<1x64xf32> to vector<16x64xf32>
    %216 = arith.mulf %214, %215 : vector<16x64xf32>
    %217 = arith.mulf %211, %202 : vector<16x64xf32>
    %218 = arith.addf %217, %216 : vector<16x64xf32>
    %219 = vector.extract_strided_slice %95 {offsets = [16, 7], sizes = [16, 1], strides = [1, 1]} : vector<32x8xf32> to vector<16x1xf32>
    %220 = vector.broadcast %219 : vector<16x1xf32> to vector<16x64xf32>
    %221 = arith.mulf %220, %218 : vector<16x64xf32>
    %cst_63 = arith.constant dense<0.000000e+00> : vector<64xf32>
    %222 = vector.multi_reduction <add>, %221, %cst_63 [0] : vector<16x64xf32> to vector<64xf32>
    %223 = vector.shape_cast %222 : vector<64xf32> to vector<1x64xf32>
    %224 = tpu.concatenate %111, %127, %143, %159, %175, %191, %207, %223 in 0 : vector<1x64xf32>, vector<1x64xf32>, vector<1x64xf32>, vector<1x64xf32>, vector<1x64xf32>, vector<1x64xf32>, vector<1x64xf32>, vector<1x64xf32> -> vector<8x64xf32>
    %225 = arith.index_cast %84 : i32 to index
    %c0_64 = arith.constant 0 : index
    %226 = vector.load %arg17[%225, %c0_64] : memref<8x64xf32, #tpu.memory_space<vmem>>, vector<8x64xf32>
    tpu.vector_store %arg17[%225, %c0_64], %224 {strides = array<i32>} : memref<8x64xf32, #tpu.memory_space<vmem>>, vector<8x64xf32>,
    %c1_i32 = arith.constant 1 : i32
    %c0_65 = arith.constant 0 : index
    %c0_66 = arith.constant 0 : index
    %227 = vector.load %arg16[%c0_65, %c0_66] : memref<16x64xf32, #tpu.memory_space<vmem>>, vector<16x64xf32>
    tpu.vector_store %arg16[%c0_65, %c0_66], %218 {strides = array<i32>} : memref<16x64xf32, #tpu.memory_space<vmem>>, vector<16x64xf32>,
    %c0_67 = arith.constant 0 : index
    %c0_68 = arith.constant 0 : index
    %228 = vector.load %arg17[%c0_67, %c0_68] : memref<8x64xf32, #tpu.memory_space<vmem>>, vector<8x64xf32>
    %c8_69 = arith.constant 8 : index
    %c0_70 = arith.constant 0 : index
    %229 = vector.load %arg15[%c8_69, %c0_70] : memref<16x64xf32, #tpu.memory_space<vmem>>, vector<8x64xf32>
    %c0_71 = arith.constant 0 : index
    %c0_72 = arith.constant 0 : index
    %230 = vector.load %arg12[%c0_71, %c0_72] : memref<1x64xf32, #tpu.memory_space<vmem>>, vector<1x64xf32>
    %231 = vector.broadcast %230 : vector<1x64xf32> to vector<8x64xf32>
    %232 = arith.mulf %229, %231 : vector<8x64xf32>
    %233 = arith.addf %228, %232 : vector<8x64xf32>
    %c0_73 = arith.constant 0 : index
    %c0_74 = arith.constant 0 : index
    %234 = vector.load %arg5[%c0_73, %c0_74] : memref<32x64xbf16, #tpu.memory_space<vmem>>, vector<32x64xbf16>
    %cst_75 = arith.constant dense<0.000000e+00> : vector<8x64xf32>
    %235 = tpu.matmul %19, %234, %cst_75 {dimension_numbers = #tpu.dot_dimension_numbers<[1], [0], [0], [1], [0, 0, 1, 1], [], []>} : vector<8x32xbf16>, vector<32x64xbf16>, vector<8x64xf32> -> vector<8x64xf32>
    %cst_76 = arith.constant 0.000000e+00 : f32
    %236 = vector.broadcast %cst_76 : f32 to vector<8x64xf32>
    %237 = arith.subf %236, %235 : vector<8x64xf32>
    %238 = math.exp %237 : vector<8x64xf32>
    %cst_77 = arith.constant 1.000000e+00 : f32
    %239 = vector.broadcast %cst_77 : f32 to vector<8x64xf32>
    %240 = arith.addf %239, %238 : vector<8x64xf32>
    %cst_78 = arith.constant 1.000000e+00 : f32
    %241 = vector.broadcast %cst_78 : f32 to vector<8x64xf32>
    %242 = arith.divf %241, %240 : vector<8x64xf32>
    %243 = arith.mulf %235, %242 : vector<8x64xf32>
    %244 = arith.mulf %233, %243 : vector<8x64xf32>
    %245 = arith.truncf %244 : vector<8x64xf32> to vector<8x64xbf16>
    %c0_79 = arith.constant 0 : index
    %c0_80 = arith.constant 0 : index
    %246 = vector.load %arg13[%c0_79, %c0_80] : memref<64x32xbf16, #tpu.memory_space<vmem>>, vector<64x32xbf16>
    %cst_81 = arith.constant dense<0.000000e+00> : vector<8x32xf32>
    %247 = tpu.matmul %245, %246, %cst_81 {dimension_numbers = #tpu.dot_dimension_numbers<[1], [0], [0], [1], [0, 0, 1, 1], [], []>} : vector<8x64xbf16>, vector<64x32xbf16>, vector<8x32xf32> -> vector<8x32xf32>
    %c0_82 = arith.constant 0 : index
    %c0_83 = arith.constant 0 : index
    %c0_84 = arith.constant 0 : index
    %248 = vector.load %arg2[%c0_82, %c0_83, %c0_84] : memref<1x8x32xbf16, #tpu.memory_space<vmem>>, vector<1x8x32xbf16>
    %249 = vector.shape_cast %248 : vector<1x8x32xbf16> to vector<8x32xbf16>
    %250 = arith.extf %249 : vector<8x32xbf16> to vector<8x32xf32>
    %251 = arith.addf %247, %250 : vector<8x32xf32>
    %252 = arith.truncf %251 : vector<8x32xf32> to vector<8x32xbf16>
    %c0_85 = arith.constant 0 : index
    %c0_86 = arith.constant 0 : index
    %c0_87 = arith.constant 0 : index
    %253 = vector.load %arg14[%c0_85, %c0_86, %c0_87] : memref<1x8x32xbf16, #tpu.memory_space<vmem>>, vector<1x8x32xbf16>
    %254 = vector.shape_cast %253 : vector<1x8x32xbf16> to vector<8x32xbf16>
    %255 = vector.shape_cast %252 : vector<8x32xbf16> to vector<1x8x32xbf16>
    tpu.vector_store %arg14[%c0_85, %c0_86, %c0_87], %255 {strides = array<i32>} : memref<1x8x32xbf16, #tpu.memory_space<vmem>>, vector<1x8x32xbf16>,
    return
  }
  func.func @transform_0(%arg0: i32, %arg1: i32) -> (i32, i32, i32) {
    %c0_i32 = arith.constant 0 : i32
    %c0_i32_0 = arith.constant 0 : i32
    return %arg0, %arg1, %c0_i32 : i32, i32, i32
  }
  func.func @transform_1(%arg0: i32, %arg1: i32) -> (i32, i32) {
    %c0_i32 = arith.constant 0 : i32
    %c0_i32_0 = arith.constant 0 : i32
    %c0_i32_1 = arith.constant 0 : i32
    return %c0_i32, %c0_i32_0 : i32, i32
  }
  func.func @transform_2(%arg0: i32, %arg1: i32) -> (i32, i32) {
    %c0_i32 = arith.constant 0 : i32
    %c0_i32_0 = arith.constant 0 : i32
    %c0_i32_1 = arith.constant 0 : i32
    return %c0_i32, %c0_i32_0 : i32, i32
  }
  func.func @transform_3(%arg0: i32, %arg1: i32) -> (i32, i32) {
    %c0_i32 = arith.constant 0 : i32
    %c0_i32_0 = arith.constant 0 : i32
    %c0_i32_1 = arith.constant 0 : i32
    return %c0_i32, %c0_i32_0 : i32, i32
  }
  func.func @transform_4(%arg0: i32, %arg1: i32) -> (i32, i32) {
    %c0_i32 = arith.constant 0 : i32
    %c0_i32_0 = arith.constant 0 : i32
    %c0_i32_1 = arith.constant 0 : i32
    return %c0_i32, %c0_i32_0 : i32, i32
  }
  func.func @transform_5(%arg0: i32, %arg1: i32) -> (i32, i32) {
    %c0_i32 = arith.constant 0 : i32
    %c0_i32_0 = arith.constant 0 : i32
    %c0_i32_1 = arith.constant 0 : i32
    return %c0_i32, %c0_i32_0 : i32, i32
  }
  func.func @transform_6(%arg0: i32, %arg1: i32) -> (i32, i32) {
    %c0_i32 = arith.constant 0 : i32
    %c0_i32_0 = arith.constant 0 : i32
    %c0_i32_1 = arith.constant 0 : i32
    return %c0_i32, %c0_i32_0 : i32, i32
  }
  func.func @transform_7(%arg0: i32, %arg1: i32) -> (i32, i32) {
    %c0_i32 = arith.constant 0 : i32
    %c0_i32_0 = arith.constant 0 : i32
    %c0_i32_1 = arith.constant 0 : i32
    return %c0_i32, %c0_i32_0 : i32, i32
  }
  func.func @transform_8(%arg0: i32, %arg1: i32) -> (i32, i32) {
    %c0_i32 = arith.constant 0 : i32
    %c0_i32_0 = arith.constant 0 : i32
    %c0_i32_1 = arith.constant 0 : i32
    return %c0_i32, %c0_i32_0 : i32, i32
  }
  func.func @transform_9(%arg0: i32, %arg1: i32) -> (i32, i32) {
    %c0_i32 = arith.constant 0 : i32
    %c0_i32_0 = arith.constant 0 : i32
    %c0_i32_1 = arith.constant 0 : i32
    return %c0_i32, %c0_i32_0 : i32, i32
  }
  func.func @transform_10(%arg0: i32, %arg1: i32) -> (i32, i32) {
    %c0_i32 = arith.constant 0 : i32
    %c0_i32_0 = arith.constant 0 : i32
    %c0_i32_1 = arith.constant 0 : i32
    return %c0_i32, %c0_i32_0 : i32, i32
  }
  func.func @transform_11(%arg0: i32, %arg1: i32) -> (i32, i32) {
    %c0_i32 = arith.constant 0 : i32
    %c0_i32_0 = arith.constant 0 : i32
    %c0_i32_1 = arith.constant 0 : i32
    return %c0_i32, %c0_i32_0 : i32, i32
  }
  func.func @transform_12(%arg0: i32, %arg1: i32) -> (i32, i32, i32) {
    %c0_i32 = arith.constant 0 : i32
    %c0_i32_0 = arith.constant 0 : i32
    return %arg0, %arg1, %c0_i32 : i32, i32, i32
  }
}

</mosaic_0001>

<llo_original>
// kernel: tpu_custom_call.1
$region0: #{tpu_custom_call.1}
  #allocation0 [shape = 'u32[]', space=smem, size = 0x4, offset = 0x4, fixed_abs, tag = 'smem constant byte address 0x4 - core index']
  #allocation1 [shape = 'u32[144,128]{1,0:T(1,128)}', space=vmem, size = 0x12000, scoped, tag = 'internal scratch']
  #allocation2 [shape = 'f32[16,64]{1,0:T(8,128)}', space=vmem, size = 0x2000, scoped, tag = 'scratch operand']
  #allocation3 [shape = 'f32[16,64]{1,0:T(8,128)}', space=vmem, size = 0x2000, scoped, tag = 'scratch operand']
  #allocation4 [shape = 'f32[8,64]{1,0:T(8,128)}', space=vmem, size = 0x1000, scoped, tag = 'scratch operand']
  #allocation5 [shape = 'f32[8,32]{1,0:T(8,128)}', space=vmem, size = 0x1000, scoped, tag = 'scratch operand']
  %s0 = inlined_call_operand.hbm [shape: bf16[2,8,32], index: 0, kind: input, shape index: {}]
  %s1 = inlined_call_operand.vmem [shape: f32[1,32], index: 1, kind: input, shape index: {}]
  %s2 = inlined_call_operand.vmem [shape: bf16[32,64], index: 2, kind: input, shape index: {}]
  %s3 = inlined_call_operand.hbm [shape: bf16[32,64], index: 3, kind: input, shape index: {}]
  %s4 = inlined_call_operand.hbm [shape: f32[4,64], index: 4, kind: input, shape index: {}]
  %s5 = inlined_call_operand.vmem [shape: f32[1,64], index: 5, kind: input, shape index: {}]
  %s6 = inlined_call_operand.vmem [shape: bf16[64,128], index: 6, kind: input, shape index: {}]
  %s7 = inlined_call_operand.hbm [shape: bf16[2,64], index: 7, kind: input, shape index: {}]
  %s8 = inlined_call_operand.hbm [shape: f32[1,64], index: 8, kind: input, shape index: {}]
  %s9 = inlined_call_operand.vmem [shape: f32[16,64], index: 9, kind: input, shape index: {}]
  %s10 = inlined_call_operand.vmem [shape: f32[1,64], index: 10, kind: input, shape index: {}]
  %s11 = inlined_call_operand.vmem [shape: bf16[64,32], index: 11, kind: input, shape index: {}]
  %s12 = inlined_call_operand.hbm [shape: bf16[2,8,32], index: 12, kind: output, shape index: {}]
  %s13 = sld [smem:[#allocation0]]
  $region105: #{tpu_custom_call.1} parent=0
    _
  %s15 = ssub.s32 1, %s13
  %s16 = scalar_select 0, %s15, %s13
  $region1: #{tpu_custom_call.1} parent=0
    #allocation6 [shape = 'u8[4096]{0}', space=vmem, size = 0x1000, scoped, tag = 'input window, operand 0']
    #allocation7 [shape = 's32[2]{0}', space=sflag, size = 0x8, scoped, tag = 'scoped memory for tpu_custom_call.1']
    #allocation8 [shape = 's32[2]{0}', space=sflag, size = 0x8, scoped, tag = 'scoped memory for tpu_custom_call.1']
    #allocation9 [shape = 'u8[8192]{0}', space=vmem, size = 0x2000, scoped, tag = 'input window, operand 3, single buffered']
    #allocation10 [shape = 's32[1]{0}', space=sflag, size = 0x4, scoped, tag = 'scoped memory for tpu_custom_call.1']
    #allocation11 [shape = 'u8[2048]{0}', space=vmem, size = 0x800, scoped, tag = 'input window, operand 4, single buffered']
    #allocation12 [shape = 'u8[512]{0}', space=vmem, size = 0x400, scoped, tag = 'input window, operand 7, single buffered']
    #allocation13 [shape = 's32[1]{0}', space=sflag, size = 0x4, scoped, tag = 'scoped memory for tpu_custom_call.1']
    #allocation14 [shape = 'u8[512]{0}', space=vmem, size = 0x400, scoped, tag = 'input window, operand 8, single buffered']
    #allocation15 [shape = 'u8[4096]{0}', space=vmem, size = 0x1000, scoped, tag = 'output window, operand 0']
    %17 = vsyncpa [#allocation7], 0
    %s18 = scalar_lea.sflag [#allocation7], 1
    %19 = vsyncpa %s18, 0
    %20 = vsyncpa [#allocation10], 0
    %21 = vsyncpa [#allocation13], 0
    %22 = vsyncpa [#allocation8], 0
    %s23 = scalar_lea.sflag [#allocation8], 1
    %24 = vsyncpa %s23, 0
    loop: start=0, step=1, limit=4
    $region2: #{tpu_custom_call.1} parent=1 // loop_pre_header
      _
    $region3: #{tpu_custom_call.1} parent=1 // loop_header
      %s26 = sphi 0, %s30
      %p27 = scmp.ge.s32.totalorder %s26, 4
      %s33 = sphi 0, %s45
      %s34 = sphi 0, %s41
      %s35 = sphi 0, %s33
      %s36 = sphi 0, %s34
      %s37 = sphi 0, %s35
      %s38 = sphi 0, %s36
      %s50 = sphi 0, %s52
      %s53 = sphi 0, %s50
      %s54 = sphi 0, %s53
      %s70 = sphi 0, %s54
      %s74 = sphi 0, %s74
      %s76 = sphi 0, %s74
      %s77 = sphi 0, %s76
      %s91 = sphi 0, %s77
      %s95 = sphi 0, %s95
      %s97 = sphi 0, %s95
      %s98 = sphi 0, %s97
      %s112 = sphi 0, %s98
      %s116 = sphi 0, %s116
      %s118 = sphi 0, %s116
      %s119 = sphi 0, %s118
      %s133 = sphi 0, %s119
      %s137 = sphi 0, %s137
      %s139 = sphi 0, %s137
      %s140 = sphi 0, %s139
      %s154 = sphi 0, %s140
      %s158 = sphi 0, %s158
      %s160 = sphi 0, %s158
      %s161 = sphi 0, %s160
      %s175 = sphi 0, %s161
      %s179 = sphi 0, %s179
      %s181 = sphi 0, %s179
      %s182 = sphi 0, %s181
      %s196 = sphi 0, %s182
      %s200 = sphi 0, %s200
      %s202 = sphi 0, %s200
      %s203 = sphi 0, %s202
      %s217 = sphi 0, %s203
      %s221 = sphi 0, %s221
      %s223 = sphi 0, %s221
      %s224 = sphi 0, %s223
      %s238 = sphi 0, %s224
      %s242 = sphi 0, %s242
      %s244 = sphi 0, %s242
      %s245 = sphi 0, %s244
      %s259 = sphi 0, %s245
      %s263 = sphi 0, %s263
      %s265 = sphi 0, %s263
      %s266 = sphi 0, %s265
      %s280 = sphi 0, %s266
      %s284 = sphi 0, %s284
      %s286 = sphi 0, %s284
      %s287 = sphi 0, %s286
      %s301 = sphi 0, %s287
      %s309 = sphi 0, %s311
      %s312 = sphi 0, %s309
      %s313 = sphi 0, %s312
      %s329 = sphi 0, %s313
    $region4: #{tpu_custom_call.1} parent=1 // loop_header_branch
      %29 = sbr.rel (%p27) target = $region8
    $region5: #{tpu_custom_call.1} parent=1 // loop_body
      %s31 = ssub.s32 %s26, 1
      %s32 = ssub.s32 %s26, 2
      %s39 = sadd.s32 1, %s34
      %p40 = scmp.ge.s32.totalorder %s39, 1
      %s41 = scalar_select %p40, 0, %s39
      %s42 = sadd.s32 1, %s33
      %s43 = scalar_select %p40, %s42, %s33
      %p44 = scmp.ge.s32.totalorder %s43, 2
      %s45 = scalar_select %p44, 0, %s43
      %s46 = ssub.s32 %s33, %s45
      %s47 = ssub.s32 %s34, %s41
      %s48 = sor.u32 %s46, %s47
      %p49 = scmp.eq.s32.totalorder %s48, 0
      %s51 = sadd.s32 %s50, 1
      %s52 = scalar_select %p49, %s50, %s51
      %p55 = pneg %p49
      %p56 = scmp.eq.s32.totalorder %s26, 1
      %p57 = por %p55, %p56
      %p58 = scmp.ne.s32.totalorder %s50, %s53
      %p59 = scmp.eq.s32.totalorder %s26, 0
      %p60 = por %p58, %p59
      %p61 = scmp.ne.s32.totalorder %s50, %s53
      %p62 = scmp.eq.s32.totalorder %s31, 1
      %p63 = por %p61, %p62
      %p64 = scmp.ne.s32.totalorder %s53, %s54
      %p65 = scmp.eq.s32.totalorder %s31, 0
      %p66 = por %p64, %p65
      %p67 = scmp.ne.s32.totalorder %s53, %s54
      %p68 = scmp.eq.s32.totalorder %s32, 1
      %p69 = por %p67, %p68
      %p71 = scmp.ne.s32.totalorder %s54, %s70
      %p72 = scmp.eq.s32.totalorder %s32, 0
      %p73 = por %p71, %p72
      %s75 = sadd.s32 %s74, 1
      %p78 = scmp.eq.s32.totalorder %s26, 1
      %p79 = scmp.ne.s32.totalorder %s74, %s76
      %p80 = scmp.eq.s32.totalorder %s26, 0
      %p81 = por %p79, %p80
      %p82 = scmp.ne.s32.totalorder %s74, %s76
      %p83 = scmp.eq.s32.totalorder %s31, 1
      %p84 = por %p82, %p83
      %p85 = scmp.ne.s32.totalorder %s76, %s77
      %p86 = scmp.eq.s32.totalorder %s31, 0
      %p87 = por %p85, %p86
      %p88 = scmp.ne.s32.totalorder %s76, %s77
      %p89 = scmp.eq.s32.totalorder %s32, 1
      %p90 = por %p88, %p89
      %p92 = scmp.ne.s32.totalorder %s77, %s91
      %p93 = scmp.eq.s32.totalorder %s32, 0
      %p94 = por %p92, %p93
      %s96 = sadd.s32 %s95, 1
      %p99 = scmp.eq.s32.totalorder %s26, 1
      %p100 = scmp.ne.s32.totalorder %s95, %s97
      %p101 = scmp.eq.s32.totalorder %s26, 0
      %p102 = por %p100, %p101
      %p103 = scmp.ne.s32.totalorder %s95, %s97
      %p104 = scmp.eq.s32.totalorder %s31, 1
      %p105 = por %p103, %p104
      %p106 = scmp.ne.s32.totalorder %s97, %s98
      %p107 = scmp.eq.s32.totalorder %s31, 0
      %p108 = por %p106, %p107
      %p109 = scmp.ne.s32.totalorder %s97, %s98
      %p110 = scmp.eq.s32.totalorder %s32, 1
      %p111 = por %p109, %p110
      %p113 = scmp.ne.s32.totalorder %s98, %s112
      %p114 = scmp.eq.s32.totalorder %s32, 0
      %p115 = por %p113, %p114
      %s117 = sadd.s32 %s116, 1
      %p120 = scmp.eq.s32.totalorder %s26, 1
      %p121 = scmp.ne.s32.totalorder %s116, %s118
      %p122 = scmp.eq.s32.totalorder %s26, 0
      %p123 = por %p121, %p122
      %p124 = scmp.ne.s32.totalorder %s116, %s118
      %p125 = scmp.eq.s32.totalorder %s31, 1
      %p126 = por %p124, %p125
      %p127 = scmp.ne.s32.totalorder %s118, %s119
      %p128 = scmp.eq.s32.totalorder %s31, 0
      %p129 = por %p127, %p128
      %p130 = scmp.ne.s32.totalorder %s118, %s119
      %p131 = scmp.eq.s32.totalorder %s32, 1
      %p132 = por %p130, %p131
      %p134 = scmp.ne.s32.totalorder %s119, %s133
      %p135 = scmp.eq.s32.totalorder %s32, 0
      %p136 = por %p134, %p135
      %s138 = sadd.s32 %s137, 1
      %p141 = scmp.eq.s32.totalorder %s26, 1
      %p142 = scmp.ne.s32.totalorder %s137, %s139
      %p143 = scmp.eq.s32.totalorder %s26, 0
      %p144 = por %p142, %p143
      %p145 = scmp.ne.s32.totalorder %s137, %s139
      %p146 = scmp.eq.s32.totalorder %s31, 1
      %p147 = por %p145, %p146
      %p148 = scmp.ne.s32.totalorder %s139, %s140
      %p149 = scmp.eq.s32.totalorder %s31, 0
      %p150 = por %p148, %p149
      %p151 = scmp.ne.s32.totalorder %s139, %s140
      %p152 = scmp.eq.s32.totalorder %s32, 1
      %p153 = por %p151, %p152
      %p155 = scmp.ne.s32.totalorder %s140, %s154
      %p156 = scmp.eq.s32.totalorder %s32, 0
      %p157 = por %p155, %p156
      %s159 = sadd.s32 %s158, 1
      %p162 = scmp.eq.s32.totalorder %s26, 1
      %p163 = scmp.ne.s32.totalorder %s158, %s160
      %p164 = scmp.eq.s32.totalorder %s26, 0
      %p165 = por %p163, %p164
      %p166 = scmp.ne.s32.totalorder %s158, %s160
      %p167 = scmp.eq.s32.totalorder %s31, 1
      %p168 = por %p166, %p167
      %p169 = scmp.ne.s32.totalorder %s160, %s161
      %p170 = scmp.eq.s32.totalorder %s31, 0
      %p171 = por %p169, %p170
      %p172 = scmp.ne.s32.totalorder %s160, %s161
      %p173 = scmp.eq.s32.totalorder %s32, 1
      %p174 = por %p172, %p173
      %p176 = scmp.ne.s32.totalorder %s161, %s175
      %p177 = scmp.eq.s32.totalorder %s32, 0
      %p178 = por %p176, %p177
      %s180 = sadd.s32 %s179, 1
      %p183 = scmp.eq.s32.totalorder %s26, 1
      %p184 = scmp.ne.s32.totalorder %s179, %s181
      %p185 = scmp.eq.s32.totalorder %s26, 0
      %p186 = por %p184, %p185
      %p187 = scmp.ne.s32.totalorder %s179, %s181
      %p188 = scmp.eq.s32.totalorder %s31, 1
      %p189 = por %p187, %p188
      %p190 = scmp.ne.s32.totalorder %s181, %s182
      %p191 = scmp.eq.s32.totalorder %s31, 0
      %p192 = por %p190, %p191
      %p193 = scmp.ne.s32.totalorder %s181, %s182
      %p194 = scmp.eq.s32.totalorder %s32, 1
      %p195 = por %p193, %p194
      %p197 = scmp.ne.s32.totalorder %s182, %s196
      %p198 = scmp.eq.s32.totalorder %s32, 0
      %p199 = por %p197, %p198
      %s201 = sadd.s32 %s200, 1
      %p204 = scmp.eq.s32.totalorder %s26, 1
      %p205 = scmp.ne.s32.totalorder %s200, %s202
      %p206 = scmp.eq.s32.totalorder %s26, 0
      %p207 = por %p205, %p206
      %p208 = scmp.ne.s32.totalorder %s200, %s202
      %p209 = scmp.eq.s32.totalorder %s31, 1
      %p210 = por %p208, %p209
      %p211 = scmp.ne.s32.totalorder %s202, %s203
      %p212 = scmp.eq.s32.totalorder %s31, 0
      %p213 = por %p211, %p212
      %p214 = scmp.ne.s32.totalorder %s202, %s203
      %p215 = scmp.eq.s32.totalorder %s32, 1
      %p216 = por %p214, %p215
      %p218 = scmp.ne.s32.totalorder %s203, %s217
      %p219 = scmp.eq.s32.totalorder %s32, 0
      %p220 = por %p218, %p219
      %s222 = sadd.s32 %s221, 1
      %p225 = scmp.eq.s32.totalorder %s26, 1
      %p226 = scmp.ne.s32.totalorder %s221, %s223
      %p227 = scmp.eq.s32.totalorder %s26, 0
      %p228 = por %p226, %p227
      %p229 = scmp.ne.s32.totalorder %s221, %s223
      %p230 = scmp.eq.s32.totalorder %s31, 1
      %p231 = por %p229, %p230
      %p232 = scmp.ne.s32.totalorder %s223, %s224
      %p233 = scmp.eq.s32.totalorder %s31, 0
      %p234 = por %p232, %p233
      %p235 = scmp.ne.s32.totalorder %s223, %s224
      %p236 = scmp.eq.s32.totalorder %s32, 1
      %p237 = por %p235, %p236
      %p239 = scmp.ne.s32.totalorder %s224, %s238
      %p240 = scmp.eq.s32.totalorder %s32, 0
      %p241 = por %p239, %p240
      %s243 = sadd.s32 %s242, 1
      %p246 = scmp.eq.s32.totalorder %s26, 1
      %p247 = scmp.ne.s32.totalorder %s242, %s244
      %p248 = scmp.eq.s32.totalorder %s26, 0
      %p249 = por %p247, %p248
      %p250 = scmp.ne.s32.totalorder %s242, %s244
      %p251 = scmp.eq.s32.totalorder %s31, 1
      %p252 = por %p250, %p251
      %p253 = scmp.ne.s32.totalorder %s244, %s245
      %p254 = scmp.eq.s32.totalorder %s31, 0
      %p255 = por %p253, %p254
      %p256 = scmp.ne.s32.totalorder %s244, %s245
      %p257 = scmp.eq.s32.totalorder %s32, 1
      %p258 = por %p256, %p257
      %p260 = scmp.ne.s32.totalorder %s245, %s259
      %p261 = scmp.eq.s32.totalorder %s32, 0
      %p262 = por %p260, %p261
      %s264 = sadd.s32 %s263, 1
      %p267 = scmp.eq.s32.totalorder %s26, 1
      %p268 = scmp.ne.s32.totalorder %s263, %s265
      %p269 = scmp.eq.s32.totalorder %s26, 0
      %p270 = por %p268, %p269
      %p271 = scmp.ne.s32.totalorder %s263, %s265
      %p272 = scmp.eq.s32.totalorder %s31, 1
      %p273 = por %p271, %p272
      %p274 = scmp.ne.s32.totalorder %s265, %s266
      %p275 = scmp.eq.s32.totalorder %s31, 0
      %p276 = por %p274, %p275
      %p277 = scmp.ne.s32.totalorder %s265, %s266
      %p278 = scmp.eq.s32.totalorder %s32, 1
      %p279 = por %p277, %p278
      %p281 = scmp.ne.s32.totalorder %s266, %s280
      %p282 = scmp.eq.s32.totalorder %s32, 0
      %p283 = por %p281, %p282
      %s285 = sadd.s32 %s284, 1
      %p288 = scmp.eq.s32.totalorder %s26, 1
      %p289 = scmp.ne.s32.totalorder %s284, %s286
      %p290 = scmp.eq.s32.totalorder %s26, 0
      %p291 = por %p289, %p290
      %p292 = scmp.ne.s32.totalorder %s284, %s286
      %p293 = scmp.eq.s32.totalorder %s31, 1
      %p294 = por %p292, %p293
      %p295 = scmp.ne.s32.totalorder %s286, %s287
      %p296 = scmp.eq.s32.totalorder %s31, 0
      %p297 = por %p295, %p296
      %p298 = scmp.ne.s32.totalorder %s286, %s287
      %p299 = scmp.eq.s32.totalorder %s32, 1
      %p300 = por %p298, %p299
      %p302 = scmp.ne.s32.totalorder %s287, %s301
      %p303 = scmp.eq.s32.totalorder %s32, 0
      %p304 = por %p302, %p303
      %s305 = ssub.s32 %s33, %s45
      %s306 = ssub.s32 %s34, %s41
      %s307 = sor.u32 %s305, %s306
      %p308 = scmp.eq.s32.totalorder %s307, 0
      %s310 = sadd.s32 %s309, 1
      %s311 = scalar_select %p308, %s309, %s310
      %p314 = pneg %p308
      %p315 = scmp.eq.s32.totalorder %s26, 1
      %p316 = por %p314, %p315
      %p317 = scmp.ne.s32.totalorder %s309, %s312
      %p318 = scmp.eq.s32.totalorder %s26, 0
      %p319 = por %p317, %p318
      %p320 = scmp.ne.s32.totalorder %s309, %s312
      %p321 = scmp.eq.s32.totalorder %s31, 1
      %p322 = por %p320, %p321
      %p323 = scmp.ne.s32.totalorder %s312, %s313
      %p324 = scmp.eq.s32.totalorder %s31, 0
      %p325 = por %p323, %p324
      %p326 = scmp.ne.s32.totalorder %s312, %s313
      %p327 = scmp.eq.s32.totalorder %s32, 1
      %p328 = por %p326, %p327
      %p330 = scmp.ne.s32.totalorder %s313, %s329
      %p331 = scmp.eq.s32.totalorder %s32, 0
      %p332 = por %p330, %p331
      %p333 = scmp.le.s32.totalorder 1, %s26
      %p334 = scmp.lt.s32.totalorder %s26, 3
      %p335 = pnand %p333, %p334
      %p336 = pneg %p335
      // Predicated region
      $region9: #{tpu_custom_call.1} parent=5 // pred_check
        _
      $region10: #{tpu_custom_call.1} parent=5 // pred_check_branch
        %338 = sbr.rel (%p335) target = $region12
      $region11: #{tpu_custom_call.1} parent=5 // pred_region
        %s339 = ssub.s32 %s26, 1
        // Predicated region
        $region13: #{tpu_custom_call.1} parent=11 // pred_check
          %p340 = pneg %p87
        $region14: #{tpu_custom_call.1} parent=11 // pred_check_branch
          %342 = sbr.rel (%p340) target = $region16
        $region15: #{tpu_custom_call.1} parent=11 // pred_region
          _
        $region16: #{tpu_custom_call.1} parent=11 // pred_fallthru
          _
        // Predicated region
        $region17: #{tpu_custom_call.1} parent=11 // pred_check
          %p343 = pneg %p108
        $region18: #{tpu_custom_call.1} parent=11 // pred_check_branch
          %345 = sbr.rel (%p343) target = $region20
        $region19: #{tpu_custom_call.1} parent=11 // pred_region
          _
        $region20: #{tpu_custom_call.1} parent=11 // pred_fallthru
          _
        // Predicated region
        $region21: #{tpu_custom_call.1} parent=11 // pred_check
          %p346 = pneg %p129
        $region22: #{tpu_custom_call.1} parent=11 // pred_check_branch
          %348 = sbr.rel (%p346) target = $region24
        $region23: #{tpu_custom_call.1} parent=11 // pred_region
          %s350 = ssub.s32 256, 256
          %351 = vsyncadd [#allocation10], %s350
          %s352 = sshll.u32 [#allocation9], 4
          %s353 = int_to_ptr.vmem [resolvable:$true] %s352
          %358 = dma.hbm_to_vmem [thread:$0]  %s3, 256, %s353, [#allocation10], 64, 64, 4
        $region24: #{tpu_custom_call.1} parent=11 // pred_fallthru
          _
        // Predicated region
        $region25: #{tpu_custom_call.1} parent=11 // pred_check
          %p359 = pneg %p150
        $region26: #{tpu_custom_call.1} parent=11 // pred_check_branch
          %361 = sbr.rel (%p359) target = $region28
        $region27: #{tpu_custom_call.1} parent=11 // pred_region
          %s363 = ssub.s32 64, 64
          %364 = vsyncadd [#allocation10], %s363
          %s366 = sshll.u32 [#allocation11], 4
          %s367 = int_to_ptr.vmem [resolvable:$true] %s366
          %369 = dma.hbm_to_vmem [thread:$0]  %s4, 64, %s367, [#allocation10]
        $region28: #{tpu_custom_call.1} parent=11 // pred_fallthru
          _
        // Predicated region
        $region29: #{tpu_custom_call.1} parent=11 // pred_check
          %p370 = pneg %p171
        $region30: #{tpu_custom_call.1} parent=11 // pred_check_branch
          %372 = sbr.rel (%p370) target = $region32
        $region31: #{tpu_custom_call.1} parent=11 // pred_region
          _
        $region32: #{tpu_custom_call.1} parent=11 // pred_fallthru
          _
        // Predicated region
        $region33: #{tpu_custom_call.1} parent=11 // pred_check
          %p373 = pneg %p192
        $region34: #{tpu_custom_call.1} parent=11 // pred_check_branch
          %375 = sbr.rel (%p373) target = $region36
        $region35: #{tpu_custom_call.1} parent=11 // pred_region
          _
        $region36: #{tpu_custom_call.1} parent=11 // pred_fallthru
          _
        // Predicated region
        $region37: #{tpu_custom_call.1} parent=11 // pred_check
          %p376 = pneg %p213
        $region38: #{tpu_custom_call.1} parent=11 // pred_check_branch
          %378 = sbr.rel (%p376) target = $region40
        $region39: #{tpu_custom_call.1} parent=11 // pred_region
          %s380 = ssub.s32 16, 16
          %381 = vsyncadd [#allocation13], %s380
          %s383 = sshll.u32 [#allocation12], 4
          %s384 = int_to_ptr.vmem [resolvable:$true] %s383
          %386 = dma.hbm_to_vmem [thread:$0]  %s7, 16, %s384, [#allocation13]
        $region40: #{tpu_custom_call.1} parent=11 // pred_fallthru
          _
        // Predicated region
        $region41: #{tpu_custom_call.1} parent=11 // pred_check
          %p387 = pneg %p234
        $region42: #{tpu_custom_call.1} parent=11 // pred_check_branch
          %389 = sbr.rel (%p387) target = $region44
        $region43: #{tpu_custom_call.1} parent=11 // pred_region
          %s391 = ssub.s32 16, 16
          %392 = vsyncadd [#allocation13], %s391
          %s394 = sshll.u32 [#allocation14], 4
          %s395 = int_to_ptr.vmem [resolvable:$true] %s394
          %397 = dma.hbm_to_vmem [thread:$0]  %s8, 16, %s395, [#allocation13]
        $region44: #{tpu_custom_call.1} parent=11 // pred_fallthru
          _
        // Predicated region
        $region45: #{tpu_custom_call.1} parent=11 // pred_check
          %p398 = pneg %p255
        $region46: #{tpu_custom_call.1} parent=11 // pred_check_branch
          %400 = sbr.rel (%p398) target = $region48
        $region47: #{tpu_custom_call.1} parent=11 // pred_region
          _
        $region48: #{tpu_custom_call.1} parent=11 // pred_fallthru
          _
        // Predicated region
        $region49: #{tpu_custom_call.1} parent=11 // pred_check
          %p401 = pneg %p276
        $region50: #{tpu_custom_call.1} parent=11 // pred_check_branch
          %403 = sbr.rel (%p401) target = $region52
        $region51: #{tpu_custom_call.1} parent=11 // pred_region
          _
        $region52: #{tpu_custom_call.1} parent=11 // pred_fallthru
          _
        // Predicated region
        $region53: #{tpu_custom_call.1} parent=11 // pred_check
          %p404 = pneg %p297
        $region54: #{tpu_custom_call.1} parent=11 // pred_check_branch
          %406 = sbr.rel (%p404) target = $region56
        $region55: #{tpu_custom_call.1} parent=11 // pred_region
          _
        $region56: #{tpu_custom_call.1} parent=11 // pred_fallthru
          _
      $region12: #{tpu_custom_call.1} parent=5 // pred_fallthru
        _
      %p407 = scmp.lt.s32.totalorder %s26, 2
      // Predicated region
      $region57: #{tpu_custom_call.1} parent=5 // pred_check
        %p408 = pneg %p407
      $region58: #{tpu_custom_call.1} parent=5 // pred_check_branch
        %410 = sbr.rel (%p408) target = $region60
      $region59: #{tpu_custom_call.1} parent=5 // pred_region
        // Predicated region
        $region61: #{tpu_custom_call.1} parent=59 // pred_check
          %p411 = pneg %p60
        $region62: #{tpu_custom_call.1} parent=59 // pred_check_branch
          %413 = sbr.rel (%p411) target = $region64
        $region63: #{tpu_custom_call.1} parent=59 // pred_region
          %s414 = sand.u32 %s50, 1
          %s415 = scalar_lea.sflag [#allocation7], %s414
          %s416 = sand.u32 %s50, 1
          %s417 = smul.addr %s416, 4
          %s418 = scalar_lea.vmem [#allocation6], %s417
          %s420 = ssub.s32 64, 64
          %421 = vsyncadd %s415, %s420
          %s422 = sadd.s32 %s34, %s33
          %s423 = smul.addr %s422, 64
          %s424 = scalar_lea.hbm %s0, %s423
          %s426 = sshll.u32 %s418, 4
          %s427 = int_to_ptr.vmem [resolvable:$true] %s426
          %429 = dma.hbm_to_vmem [thread:$0]  %s424, 64, %s427, %s415
        $region64: #{tpu_custom_call.1} parent=59 // pred_fallthru
          _
      $region60: #{tpu_custom_call.1} parent=5 // pred_fallthru
        _
      %p430 = scmp.le.s32.totalorder 1, %s26
      %p431 = scmp.lt.s32.totalorder %s26, 3
      %p432 = pnand %p430, %p431
      %p433 = pneg %p432
      // Predicated region
      $region65: #{tpu_custom_call.1} parent=5 // pred_check
        _
      $region66: #{tpu_custom_call.1} parent=5 // pred_check_branch
        %435 = sbr.rel (%p432) target = $region68
      $region67: #{tpu_custom_call.1} parent=5 // pred_region
        %s436 = ssub.s32 %s26, 1
        %s437 = sand.u32 %s53, 1
        %s438 = scalar_lea.sflag [#allocation7], %s437
        %s439 = sand.u32 %s53, 1
        %s440 = smul.addr %s439, 4
        %s441 = scalar_lea.vmem [#allocation6], %s440
        // Predicated region
        $region69: #{tpu_custom_call.1} parent=67 // pred_check
          %p442 = pneg %p66
        $region70: #{tpu_custom_call.1} parent=67 // pred_check_branch
          %444 = sbr.rel (%p442) target = $region72
        $region71: #{tpu_custom_call.1} parent=67 // pred_region
          %445 = dma.done %s438, 64
        $region72: #{tpu_custom_call.1} parent=67 // pred_fallthru
          _
        // Predicated region
        $region73: #{tpu_custom_call.1} parent=67 // pred_check
          %p446 = pneg %p129
        $region74: #{tpu_custom_call.1} parent=67 // pred_check_branch
          %448 = sbr.rel (%p446) target = $region76
        $region75: #{tpu_custom_call.1} parent=67 // pred_region
          %449 = dma.done [#allocation10], 256
        $region76: #{tpu_custom_call.1} parent=67 // pred_fallthru
          _
        // Predicated region
        $region77: #{tpu_custom_call.1} parent=67 // pred_check
          %p450 = pneg %p150
        $region78: #{tpu_custom_call.1} parent=67 // pred_check_branch
          %452 = sbr.rel (%p450) target = $region80
        $region79: #{tpu_custom_call.1} parent=67 // pred_region
          %453 = dma.done [#allocation10], 64
        $region80: #{tpu_custom_call.1} parent=67 // pred_fallthru
          _
        // Predicated region
        $region81: #{tpu_custom_call.1} parent=67 // pred_check
          %p454 = pneg %p213
        $region82: #{tpu_custom_call.1} parent=67 // pred_check_branch
          %456 = sbr.rel (%p454) target = $region84
        $region83: #{tpu_custom_call.1} parent=67 // pred_region
          %457 = dma.done [#allocation13], 16
        $region84: #{tpu_custom_call.1} parent=67 // pred_fallthru
          _
        // Predicated region
        $region85: #{tpu_custom_call.1} parent=67 // pred_check
          %p458 = pneg %p234
        $region86: #{tpu_custom_call.1} parent=67 // pred_check_branch
          %460 = sbr.rel (%p458) target = $region88
        $region87: #{tpu_custom_call.1} parent=67 // pred_region
          %461 = dma.done [#allocation13], 16
        $region88: #{tpu_custom_call.1} parent=67 // pred_fallthru
          _
        %s462 = sand.u32 %s53, 1
        %s463 = scalar_lea.sflag [#allocation7], %s462
        %s464 = sand.u32 %s53, 1
        %s465 = smul.addr %s464, 4
        %s466 = scalar_lea.vmem [#allocation6], %s465
        %p467 = pneg %p66
        %p468 = pneg %p63
        %p469 = pneg %p87
        %p470 = pneg %p84
        %p471 = pneg %p108
        %p472 = pneg %p105
        %p473 = pneg %p129
        %p474 = pneg %p126
        %p475 = pneg %p150
        %p476 = pneg %p147
        %p477 = pneg %p171
        %p478 = pneg %p168
        %p479 = pneg %p192
        %p480 = pneg %p189
        %p481 = pneg %p213
        %p482 = pneg %p210
        %p483 = pneg %p234
        %p484 = pneg %p231
        %p485 = pneg %p255
        %p486 = pneg %p252
        %p487 = pneg %p276
        %p488 = pneg %p273
        %p489 = pneg %p297
        %p490 = pneg %p294
        %p491 = pneg %p325
        %p492 = pneg %p322
        %s493 = sand.u32 %s312, 1
        %s494 = scalar_lea.sflag [#allocation8], %s493
        %s495 = sand.u32 %s312, 1
        %s496 = smul.addr %s495, 4
        %s497 = scalar_lea.vmem [#allocation15], %s496
        %p499 = scmp.eq.s32.totalorder %s36, 0
        // Predicated region
        $region89: #{tpu_custom_call.1} parent=67 // pred_check
          %p500 = pneg %p499
        $region90: #{tpu_custom_call.1} parent=67 // pred_check_branch
          %502 = sbr.rel (%p500) target = $region92
        $region91: #{tpu_custom_call.1} parent=67 // pred_region
          %vm503 = vcmask 523264
          %504 = vst.msk [vmem:[#allocation2] sm:$0xff] %vm503, 0.0
          %505 = vst.msk [vmem:[#allocation3] sm:$0xff] %vm503, 0.0
          %506 = vst.msk [vmem:[#allocation3 + $0x8] sm:$0xff] %vm503, 0.0
        $region92: #{tpu_custom_call.1} parent=67 // pred_fallthru
          _
        %v507 = vld [vmem:[%s441] sm:$0xf]
        %v508 = vunpack.c.l.bf16 %v507
        %v509 = vld [vmem:[%s1] sm:$0x1]
        %v510 = vmul.f32 %v508, %v508
        %vm511 = vcmask 261120
        %v512 = vsel %vm511, %v510, 0.0
        %513 = vadd.xlane.f32.xlu0 %v512
        %v514 = vpop.xlane.xlu0 %513
        %v515 = vrcp.pop 32.0
        %v516 = vmul.f32 %v514, %v515
        %v517 = vadd.f32 %v516, 1e-05
        %v518 = vrsqrt.pop %v517
        %v519 = vmul.f32 %v508, %v518
        %v521 = vlaneseq
        %v522 = vshrl.u32 %v521, 7
        %v523 = vsub.s32 0, %v522
        %v524 = vrot.slane %v509, %v523
        %v526 = vmul.f32 %v519, %v524
        %v527 = vpack.c.bf16 %v526, %v526
        %v528 = vld [vmem:[%s2] sm:$0xf]
        %v529 = vld [vmem:[%s2 + $0x4] sm:$0xf]
        %v530 = vld [vmem:[%s2 + $0x8] sm:$0xf]
        %v531 = vld [vmem:[%s2 + $0xc] sm:$0xf]
        %v536 = vunpack.c.l.b16 %v528
        %v537 = vunpack.c.l.b16 %v529
        %v538 = vunpack.c.l.b16 %v530
        %v539 = vunpack.c.l.b16 %v531
        %v540 = vpack.c.b16 %v537, %v536
        %v541 = vpack.c.b16 %v539, %v538
        %v545 = vsel %vm511, %v527, 0
        %547 = vmatprep.subr.bf16.mxu0 0
        %548 = vmatpush1.bf16.msra.mxu0 %v540
        %549 = vmatprep.subr.bf16.mxu0 0
        %550 = vmatpush1.bf16.msra.mxu0 %v541
        %551 = vmatprep.subr.bf16.mxu0 0
        %552 = vmatpush1.bf16.msra.mxu0 0
        %553 = vmatprep.subr.bf16.mxu0 0
        %554 = vmatpush1.bf16.msra.mxu0 0
        %555 = vmatprep.subr.bf16.mxu0 0
        %556 = vmatpush1.bf16.msra.mxu0 0
        %557 = vmatprep.subr.bf16.mxu0 0
        %558 = vmatpush1.bf16.msra.mxu0 0
        %559 = vmatprep.subr.bf16.mxu0 0
        %560 = vmatpush1.bf16.msra.mxu0 0
        %561 = vmatprep.subr.bf16.mxu0 0
        %562 = vmatpush1.bf16.msra.mxu0 0
        %563 = vmatprep.subr.bf16.mxu0 0
        %564 = vmatpush1.bf16.msra.mxu0 0
        %565 = vmatprep.subr.bf16.mxu0 0
        %566 = vmatpush1.bf16.msra.mxu0 0
        %567 = vmatprep.subr.bf16.mxu0 0
        %568 = vmatpush1.bf16.msra.mxu0 0
        %569 = vmatprep.subr.bf16.mxu0 0
        %570 = vmatpush1.bf16.msra.mxu0 0
        %571 = vmatprep.subr.bf16.mxu0 0
        %572 = vmatpush1.bf16.msra.mxu0 0
        %573 = vmatprep.subr.bf16.mxu0 0
        %574 = vmatpush1.bf16.msra.mxu0 0
        %575 = vmatprep.subr.bf16.mxu0 0
        %576 = vmatpush1.bf16.msra.mxu0 0
        %577 = vmatprep.subr.bf16.mxu0 0
        %578 = vmatpush1.bf16.msra.mxu0 0
        %579 = vmatprep.mubr.bf16.mxu0 0
        %580 = vmatmul.mubr.bf16.gmra.mrb[0].mxu0 %v545
        %v581 = vpop.f32.mrb[0].mxu0
        %v582 = vadd.f32 0.0, %v581
        %v583 = vpop.f32.mrb[0].mxu0
        %v584 = vpop.f32.mrb[0].mxu0
        %v585 = vpop.f32.mrb[0].mxu0
        %586 = vdwg.mxu0
        %vm587 = vcmask 523264
        %588 = vst.msk [vmem:[#allocation2 + $0x8] sm:$0xff] %vm587, %v582
        %v589 = vld [vmem:[%s5] sm:$0x1]
        %v590 = vld [vmem:[#allocation11 + $0x3] sm:$0x1]
        %v591 = vlaneseq
        %v592 = vshrl.u32 %v591, 7
        %v593 = vsub.s32 0, %v592
        %v594 = vrot.slane %v590, %v593
        %v595 = vmul.f32 %v582, %v594
        %v597 = vlaneseq
        %v598 = vshrl.u32 %v597, 7
        %v599 = vsub.s32 0, %v598
        %v600 = vrot.slane %v589, %v599
        %v602 = vadd.f32 %v600, %v595
        %v603 = vld [vmem:[#allocation2 + $0x7] sm:$0xff]
        %v604 = vld [vmem:[#allocation11 + $0x2] sm:$0x1]
        %v605 = vlaneseq
        %v606 = vshrl.u32 %v605, 7
        %v607 = vsub.s32 0, %v606
        %v608 = vrot.slane %v604, %v607
        %v609 = vmul.f32 %v603, %v608
        %v610 = vadd.f32 %v602, %v609
        %v611 = vld [vmem:[#allocation2 + $0x6] sm:$0xff]
        %v612 = vld [vmem:[#allocation11 + $0x1] sm:$0x1]
        %v613 = vlaneseq
        %v614 = vshrl.u32 %v613, 7
        %v615 = vsub.s32 0, %v614
        %v616 = vrot.slane %v612, %v615
        %v617 = vmul.f32 %v611, %v616
        %v618 = vadd.f32 %v610, %v617
        %v619 = vld [vmem:[#allocation2 + $0x5] sm:$0xff]
        %v620 = vld [vmem:[#allocation11] sm:$0x1]
        %v621 = vlaneseq
        %v622 = vshrl.u32 %v621, 7
        %v623 = vsub.s32 0, %v622
        %v624 = vrot.slane %v620, %v623
        %v625 = vmul.f32 %v619, %v624
        %v626 = vadd.f32 %v618, %v625
        %v627 = vsub.f32 0.0, %v626
        %v628 = vmul.f32 %v627, 1.442695
        %v629 = vpow.pop %v628
        %v630 = vadd.f32 %v629, 1.0
        %v631 = vrcp.pop %v630
        %v632 = vmul.f32 1.0, %v631
        %v633 = vmul.f32 %v626, %v632
        %v634 = vld [vmem:[#allocation2 + $0x8] sm:$0xff]
        %635 = vst.msk [vmem:[#allocation2] sm:$0xff] %vm587, %v634
        %636 = vst.msk [vmem:[#allocation2 + $0x8] sm:$0xff] %vm587, %v633
        %v637 = vpack.c.bf16 %v633, %v633
        %v638 = vld [vmem:[%s6] sm:$0xf]
        %v639 = vld [vmem:[%s6 + $0x4] sm:$0xf]
        %v640 = vld [vmem:[%s6 + $0x8] sm:$0xf]
        %v641 = vld [vmem:[%s6 + $0xc] sm:$0xf]
        %v642 = vld [vmem:[%s6 + $0x10] sm:$0xf]
        %v643 = vld [vmem:[%s6 + $0x14] sm:$0xf]
        %v644 = vld [vmem:[%s6 + $0x18] sm:$0xf]
        %v645 = vld [vmem:[%s6 + $0x1c] sm:$0xf]
        %v654 = vunpack.c.l.b16 %v638
        %v655 = vunpack.c.l.b16 %v639
        %v656 = vunpack.c.l.b16 %v640
        %v657 = vunpack.c.l.b16 %v641
        %v658 = vunpack.c.l.b16 %v642
        %v659 = vunpack.c.l.b16 %v643
        %v660 = vunpack.c.l.b16 %v644
        %v661 = vunpack.c.l.b16 %v645
        %v662 = vpack.c.b16 %v655, %v654
        %v663 = vpack.c.b16 %v657, %v656
        %v664 = vpack.c.b16 %v659, %v658
        %v665 = vpack.c.b16 %v661, %v660
        %v671 = vsel %vm587, %v637, 0
        %673 = vmatprep.subr.bf16.mxu0 0
        %674 = vmatpush1.bf16.msra.mxu0 %v662
        %675 = vmatprep.subr.bf16.mxu0 0
        %676 = vmatpush1.bf16.msra.mxu0 %v663
        %677 = vmatprep.subr.bf16.mxu0 0
        %678 = vmatpush1.bf16.msra.mxu0 %v664
        %679 = vmatprep.subr.bf16.mxu0 0
        %680 = vmatpush1.bf16.msra.mxu0 %v665
        %681 = vmatprep.subr.bf16.mxu0 0
        %682 = vmatpush1.bf16.msra.mxu0 0
        %683 = vmatprep.subr.bf16.mxu0 0
        %684 = vmatpush1.bf16.msra.mxu0 0
        %685 = vmatprep.subr.bf16.mxu0 0
        %686 = vmatpush1.bf16.msra.mxu0 0
        %687 = vmatprep.subr.bf16.mxu0 0
        %688 = vmatpush1.bf16.msra.mxu0 0
        %689 = vmatprep.subr.bf16.mxu0 0
        %690 = vmatpush1.bf16.msra.mxu0 0
        %691 = vmatprep.subr.bf16.mxu0 0
        %692 = vmatpush1.bf16.msra.mxu0 0
        %693 = vmatprep.subr.bf16.mxu0 0
        %694 = vmatpush1.bf16.msra.mxu0 0
        %695 = vmatprep.subr.bf16.mxu0 0
        %696 = vmatpush1.bf16.msra.mxu0 0
        %697 = vmatprep.subr.bf16.mxu0 0
        %698 = vmatpush1.bf16.msra.mxu0 0
        %699 = vmatprep.subr.bf16.mxu0 0
        %700 = vmatpush1.bf16.msra.mxu0 0
        %701 = vmatprep.subr.bf16.mxu0 0
        %702 = vmatpush1.bf16.msra.mxu0 0
        %703 = vmatprep.subr.bf16.mxu0 0
        %704 = vmatpush1.bf16.msra.mxu0 0
        %705 = vmatprep.mubr.bf16.mxu0 0
        %706 = vmatmul.mubr.bf16.gmra.mrb[0].mxu0 %v671
        %v707 = vpop.f32.mrb[0].mxu0
        %v708 = vadd.f32 0.0, %v707
        %v709 = vpop.f32.mrb[0].mxu0
        %v710 = vpop.f32.mrb[0].mxu0
        %v711 = vpop.f32.mrb[0].mxu0
        %712 = vdwg.mxu0
        %v713 = vpack.c.bf16 %v708, %v708
        %v714 = vld [vmem:[#allocation12] sm:$0x1]
        %v715 = vld [vmem:[#allocation14] sm:$0x1]
        %v717 = vlaneseq
        %v718 = vshrl.u32 %v717, 7
        %v719 = vsub.s32 0, %v718
        %v720 = vrot.slane %v715, %v719
        %vm722 = vcmask 15360
        %v724 = vsel %vm722, %v713, 0
        %vm726 = vcmask 1040384
        %v728 = vsel %vm726, %v714, 0
        %730 = vmatprep.subr.bf16.mxu0 0
        %731 = vmatpush1.bf16.msra.mxu0 %v728
        %732 = vmatprep.subr.bf16.mxu0 0
        %733 = vmatpush1.bf16.msra.mxu0 0
        %734 = vmatprep.subr.bf16.mxu0 0
        %735 = vmatpush1.bf16.msra.mxu0 0
        %736 = vmatprep.subr.bf16.mxu0 0
        %737 = vmatpush1.bf16.msra.mxu0 0
        %738 = vmatprep.subr.bf16.mxu0 0
        %739 = vmatpush1.bf16.msra.mxu0 0
        %740 = vmatprep.subr.bf16.mxu0 0
        %741 = vmatpush1.bf16.msra.mxu0 0
        %742 = vmatprep.subr.bf16.mxu0 0
        %743 = vmatpush1.bf16.msra.mxu0 0
        %744 = vmatprep.subr.bf16.mxu0 0
        %745 = vmatpush1.bf16.msra.mxu0 0
        %746 = vmatprep.subr.bf16.mxu0 0
        %747 = vmatpush1.bf16.msra.mxu0 0
        %748 = vmatprep.subr.bf16.mxu0 0
        %749 = vmatpush1.bf16.msra.mxu0 0
        %750 = vmatprep.subr.bf16.mxu0 0
        %751 = vmatpush1.bf16.msra.mxu0 0
        %752 = vmatprep.subr.bf16.mxu0 0
        %753 = vmatpush1.bf16.msra.mxu0 0
        %754 = vmatprep.subr.bf16.mxu0 0
        %755 = vmatpush1.bf16.msra.mxu0 0
        %756 = vmatprep.subr.bf16.mxu0 0
        %757 = vmatpush1.bf16.msra.mxu0 0
        %758 = vmatprep.subr.bf16.mxu0 0
        %759 = vmatpush1.bf16.msra.mxu0 0
        %760 = vmatprep.subr.bf16.mxu0 0
        %761 = vmatpush1.bf16.msra.mxu0 0
        %762 = vmatprep.mubr.bf16.mxu0 0
        %763 = vmatmul.mubr.bf16.gmra.mrb[0].mxu0 %v724
        %v764 = vpop.f32.mrb[0].mxu0
        %v765 = vadd.f32 %v720, %v764
        %v766 = vpop.f32.mrb[0].mxu0
        %v767 = vpop.f32.mrb[0].mxu0
        %v768 = vpop.f32.mrb[0].mxu0
        %769 = vdwg.mxu0
        %v770 = vmax.f32 %v765, 0.0
        %v771 = vand.u32 2147483647, %v765
        %v772 = vsub.f32 0.0, %v771
        %v773 = vmul.f32 %v772, 1.442695
        %v774 = vpow.pop %v773
        %v775 = vadd.f32 %v774, 1.0
        %v776 = vlog2.pop %v775
        %v777 = vmul.f32 %v776, 0.6931472
        %v778 = vadd.f32 %v770, %v777
        %779 = vst.msk [vmem:[#allocation4] sm:$0xff] %vm587, %v778
        %781 = vrot.lane.b32.xlu0 %v708, 126
        %v782 = vpop.permute.xlu0 %781
        %784 = vst.msk [vmem:[#allocation5] sm:$0xff] %vm511, %v782
        %v785 = vld [vmem:[%s9] sm:$0xff]
        %v786 = vld [vmem:[%s9 + $0x8] sm:$0xff]
        %v787 = vmul.f32 %v785, 1.442695
        %v788 = vpow.pop %v787
        %v789 = vmul.f32 %v786, 1.442695
        %v790 = vpow.pop %v789
        %v791 = vsub.f32 0.0, %v788
        %v792 = vsub.f32 0.0, %v790
        %v793 = vld [vmem:[#allocation3] sm:$0xff]
        %v794 = vld [vmem:[#allocation3 + $0x8] sm:$0xff]
        %v795 = vld [vmem:[#allocation4] sm:$0xff]
        %s796 = scalar_lea.vmem [#allocation2], 8
        %v797 = vld [vmem:[%s796] sm:$0xff]
        %v798 = vmul.f32 %v795, %v797
        %v799 = vld [vmem:[#allocation5] sm:$0xff]
        %800 = vxpose.xlu0.b32.start [1/16] %v799, 128
        %801 = vxpose.xlu0.b32.cont [2/16] 0.0, 128
        %802 = vxpose.xlu0.b32.cont [3/16] 0.0, 128
        %803 = vxpose.xlu0.b32.cont [4/16] 0.0, 128
        %804 = vxpose.xlu0.b32.cont [5/16] 0.0, 128
        %805 = vxpose.xlu0.b32.cont [6/16] 0.0, 128
        %806 = vxpose.xlu0.b32.cont [7/16] 0.0, 128
        %807 = vxpose.xlu0.b32.cont [8/16] 0.0, 128
        %808 = vxpose.xlu0.b32.cont [9/16] 0.0, 128
        %809 = vxpose.xlu0.b32.cont [10/16] 0.0, 128
        %810 = vxpose.xlu0.b32.cont [11/16] 0.0, 128
        %811 = vxpose.xlu0.b32.cont [12/16] 0.0, 128
        %812 = vxpose.xlu0.b32.cont [13/16] 0.0, 128
        %813 = vxpose.xlu0.b32.cont [14/16] 0.0, 128
        %814 = vxpose.xlu0.b32.cont [15/16] 0.0, 128
        %815 = vxpose.xlu0.b32.end [16/16] 0.0, 128
        %v816 = vpop.trf.xlu0
        %v817 = vpop.trf.xlu0
        %v818 = vpop.trf.xlu0
        %v819 = vpop.trf.xlu0
        %v820 = vpop.trf.xlu0
        %v821 = vpop.trf.xlu0
        %v822 = vpop.trf.xlu0
        %v823 = vpop.trf.xlu0
        %v824 = vpop.trf.xlu0
        %v825 = vpop.trf.xlu0
        %v826 = vpop.trf.xlu0
        %v827 = vpop.trf.xlu0
        %v828 = vpop.trf.xlu0
        %v829 = vpop.trf.xlu0
        %v830 = vpop.trf.xlu0
        %v831 = vpop.trf.xlu0
        %v832 = vlaneseq
        %v833 = vshrl.u32 %v832, 7
        %v834 = vsub.s32 0, %v833
        %v835 = vrot.slane %v795, %v834
        %v836 = vmul.f32 %v835, %v791
        %v837 = vmul.f32 %v835, %v792
        %v838 = vmul.f32 %v836, 1.442695
        %v839 = vpow.pop %v838
        %v840 = vmul.f32 %v837, 1.442695
        %v841 = vpow.pop %v840
        %843 = vset.pattern.permute.xlu0 0
        %844 = vperm.xlu0 %843, %v816
        %v845 = vpop.permute.xlu0 %844
        %848 = vset.pattern.permute.xlu0 0
        %849 = vperm.xlu0 %848, %v817
        %v850 = vpop.permute.xlu0 %849
        %v852 = vlaneseq
        %v853 = vshrl.u32 %v852, 7
        %v854 = vsub.s32 0, %v853
        %v855 = vrot.slane %v798, %v854
        %v856 = vmul.f32 %v845, %v855
        %v857 = vmul.f32 %v850, %v855
        %v858 = vmul.f32 %v839, %v793
        %v859 = vmul.f32 %v841, %v794
        %v860 = vadd.f32 %v858, %v856
        %v861 = vadd.f32 %v859, %v857
        %863 = vset.pattern.permute.xlu0 0
        %864 = vperm.xlu0 %863, %v818
        %v865 = vpop.permute.xlu0 %864
        %868 = vset.pattern.permute.xlu0 0
        %869 = vperm.xlu0 %868, %v819
        %v870 = vpop.permute.xlu0 %869
        %v872 = vmul.f32 %v865, %v860
        %v873 = vmul.f32 %v870, %v861
        %v874 = vsel %vm587, %v872, 0.0
        %v875 = vsel %vm587, %v873, 0.0
        %v876 = vadd.f32 %v874, %v875
        %v877 = vrot.slane %v876, 4
        %v878 = vadd.f32 %v876, %v877
        %v879 = vrot.slane %v878, 2
        %v880 = vadd.f32 %v878, %v879
        %v881 = vrot.slane %v880, 1
        %v882 = vadd.f32 %v880, %v881
        %v883 = vlaneseq
        %v884 = vshrl.u32 %v883, 7
        %v885 = vsub.s32 1, %v884
        %v886 = vrot.slane %v795, %v885
        %v887 = vmul.f32 %v886, %v791
        %v888 = vmul.f32 %v886, %v792
        %v889 = vmul.f32 %v887, 1.442695
        %v890 = vpow.pop %v889
        %v891 = vmul.f32 %v888, 1.442695
        %v892 = vpow.pop %v891
        %893 = vset.pattern.permute.xlu0 1
        %894 = vperm.xlu0 %893, %v816
        %v895 = vpop.permute.xlu0 %894
        %897 = vset.pattern.permute.xlu0 1
        %898 = vperm.xlu0 %897, %v817
        %v899 = vpop.permute.xlu0 %898
        %v901 = vlaneseq
        %v902 = vshrl.u32 %v901, 7
        %v903 = vsub.s32 1, %v902
        %v904 = vrot.slane %v798, %v903
        %v905 = vmul.f32 %v895, %v904
        %v906 = vmul.f32 %v899, %v904
        %v907 = vmul.f32 %v890, %v860
        %v908 = vmul.f32 %v892, %v861
        %v909 = vadd.f32 %v907, %v905
        %v910 = vadd.f32 %v908, %v906
        %911 = vset.pattern.permute.xlu0 1
        %912 = vperm.xlu0 %911, %v818
        %v913 = vpop.permute.xlu0 %912
        %915 = vset.pattern.permute.xlu0 1
        %916 = vperm.xlu0 %915, %v819
        %v917 = vpop.permute.xlu0 %916
        %v919 = vmul.f32 %v913, %v909
        %v920 = vmul.f32 %v917, %v910
        %v921 = vsel %vm587, %v919, 0.0
        %v922 = vsel %vm587, %v920, 0.0
        %v923 = vadd.f32 %v921, %v922
        %v924 = vrot.slane %v923, 4
        %v925 = vadd.f32 %v923, %v924
        %v926 = vrot.slane %v925, 2
        %v927 = vadd.f32 %v925, %v926
        %v928 = vrot.slane %v927, 1
        %v929 = vadd.f32 %v927, %v928
        %v930 = vlaneseq
        %v931 = vshrl.u32 %v930, 7
        %v932 = vsub.s32 2, %v931
        %v933 = vrot.slane %v795, %v932
        %v934 = vmul.f32 %v933, %v791
        %v935 = vmul.f32 %v933, %v792
        %v936 = vmul.f32 %v934, 1.442695
        %v937 = vpow.pop %v936
        %v938 = vmul.f32 %v935, 1.442695
        %v939 = vpow.pop %v938
        %940 = vset.pattern.permute.xlu0 2
        %941 = vperm.xlu0 %940, %v816
        %v942 = vpop.permute.xlu0 %941
        %944 = vset.pattern.permute.xlu0 2
        %945 = vperm.xlu0 %944, %v817
        %v946 = vpop.permute.xlu0 %945
        %v948 = vlaneseq
        %v949 = vshrl.u32 %v948, 7
        %v950 = vsub.s32 2, %v949
        %v951 = vrot.slane %v798, %v950
        %v952 = vmul.f32 %v942, %v951
        %v953 = vmul.f32 %v946, %v951
        %v954 = vmul.f32 %v937, %v909
        %v955 = vmul.f32 %v939, %v910
        %v956 = vadd.f32 %v954, %v952
        %v957 = vadd.f32 %v955, %v953
        %958 = vset.pattern.permute.xlu0 2
        %959 = vperm.xlu0 %958, %v818
        %v960 = vpop.permute.xlu0 %959
        %962 = vset.pattern.permute.xlu0 2
        %963 = vperm.xlu0 %962, %v819
        %v964 = vpop.permute.xlu0 %963
        %v966 = vmul.f32 %v960, %v956
        %v967 = vmul.f32 %v964, %v957
        %v968 = vsel %vm587, %v966, 0.0
        %v969 = vsel %vm587, %v967, 0.0
        %v970 = vadd.f32 %v968, %v969
        %v971 = vrot.slane %v970, 4
        %v972 = vadd.f32 %v970, %v971
        %v973 = vrot.slane %v972, 2
        %v974 = vadd.f32 %v972, %v973
        %v975 = vrot.slane %v974, 1
        %v976 = vadd.f32 %v974, %v975
        %v977 = vlaneseq
        %v978 = vshrl.u32 %v977, 7
        %v979 = vsub.s32 3, %v978
        %v980 = vrot.slane %v795, %v979
        %v981 = vmul.f32 %v980, %v791
        %v982 = vmul.f32 %v980, %v792
        %v983 = vmul.f32 %v981, 1.442695
        %v984 = vpow.pop %v983
        %v985 = vmul.f32 %v982, 1.442695
        %v986 = vpow.pop %v985
        %987 = vset.pattern.permute.xlu0 3
        %988 = vperm.xlu0 %987, %v816
        %v989 = vpop.permute.xlu0 %988
        %991 = vset.pattern.permute.xlu0 3
        %992 = vperm.xlu0 %991, %v817
        %v993 = vpop.permute.xlu0 %992
        %v995 = vlaneseq
        %v996 = vshrl.u32 %v995, 7
        %v997 = vsub.s32 3, %v996
        %v998 = vrot.slane %v798, %v997
        %v999 = vmul.f32 %v989, %v998
        %v1000 = vmul.f32 %v993, %v998
        %v1001 = vmul.f32 %v984, %v956
        %v1002 = vmul.f32 %v986, %v957
        %v1003 = vadd.f32 %v1001, %v999
        %v1004 = vadd.f32 %v1002, %v1000
        %1005 = vset.pattern.permute.xlu0 3
        %1006 = vperm.xlu0 %1005, %v818
        %v1007 = vpop.permute.xlu0 %1006
        %1009 = vset.pattern.permute.xlu0 3
        %1010 = vperm.xlu0 %1009, %v819
        %v1011 = vpop.permute.xlu0 %1010
        %v1013 = vmul.f32 %v1007, %v1003
        %v1014 = vmul.f32 %v1011, %v1004
        %v1015 = vsel %vm587, %v1013, 0.0
        %v1016 = vsel %vm587, %v1014, 0.0
        %v1017 = vadd.f32 %v1015, %v1016
        %v1018 = vrot.slane %v1017, 4
        %v1019 = vadd.f32 %v1017, %v1018
        %v1020 = vrot.slane %v1019, 2
        %v1021 = vadd.f32 %v1019, %v1020
        %v1022 = vrot.slane %v1021, 1
        %v1023 = vadd.f32 %v1021, %v1022
        %v1024 = vlaneseq
        %v1025 = vshrl.u32 %v1024, 7
        %v1026 = vsub.s32 4, %v1025
        %v1027 = vrot.slane %v795, %v1026
        %v1028 = vmul.f32 %v1027, %v791
        %v1029 = vmul.f32 %v1027, %v792
        %v1030 = vmul.f32 %v1028, 1.442695
        %v1031 = vpow.pop %v1030
        %v1032 = vmul.f32 %v1029, 1.442695
        %v1033 = vpow.pop %v1032
        %1034 = vset.pattern.permute.xlu0 4
        %1035 = vperm.xlu0 %1034, %v816
        %v1036 = vpop.permute.xlu0 %1035
        %1038 = vset.pattern.permute.xlu0 4
        %1039 = vperm.xlu0 %1038, %v817
        %v1040 = vpop.permute.xlu0 %1039
        %v1042 = vlaneseq
        %v1043 = vshrl.u32 %v1042, 7
        %v1044 = vsub.s32 4, %v1043
        %v1045 = vrot.slane %v798, %v1044
        %v1046 = vmul.f32 %v1036, %v1045
        %v1047 = vmul.f32 %v1040, %v1045
        %v1048 = vmul.f32 %v1031, %v1003
        %v1049 = vmul.f32 %v1033, %v1004
        %v1050 = vadd.f32 %v1048, %v1046
        %v1051 = vadd.f32 %v1049, %v1047
        %1052 = vset.pattern.permute.xlu0 4
        %1053 = vperm.xlu0 %1052, %v818
        %v1054 = vpop.permute.xlu0 %1053
        %1056 = vset.pattern.permute.xlu0 4
        %1057 = vperm.xlu0 %1056, %v819
        %v1058 = vpop.permute.xlu0 %1057
        %v1060 = vmul.f32 %v1054, %v1050
        %v1061 = vmul.f32 %v1058, %v1051
        %v1062 = vsel %vm587, %v1060, 0.0
        %v1063 = vsel %vm587, %v1061, 0.0
        %v1064 = vadd.f32 %v1062, %v1063
        %v1065 = vrot.slane %v1064, 4
        %v1066 = vadd.f32 %v1064, %v1065
        %v1067 = vrot.slane %v1066, 2
        %v1068 = vadd.f32 %v1066, %v1067
        %v1069 = vrot.slane %v1068, 1
        %v1070 = vadd.f32 %v1068, %v1069
        %v1071 = vlaneseq
        %v1072 = vshrl.u32 %v1071, 7
        %v1073 = vsub.s32 5, %v1072
        %v1074 = vrot.slane %v795, %v1073
        %v1075 = vmul.f32 %v1074, %v791
        %v1076 = vmul.f32 %v1074, %v792
        %v1077 = vmul.f32 %v1075, 1.442695
        %v1078 = vpow.pop %v1077
        %v1079 = vmul.f32 %v1076, 1.442695
        %v1080 = vpow.pop %v1079
        %1081 = vset.pattern.permute.xlu0 5
        %1082 = vperm.xlu0 %1081, %v816
        %v1083 = vpop.permute.xlu0 %1082
        %1085 = vset.pattern.permute.xlu0 5
        %1086 = vperm.xlu0 %1085, %v817
        %v1087 = vpop.permute.xlu0 %1086
        %v1089 = vlaneseq
        %v1090 = vshrl.u32 %v1089, 7
        %v1091 = vsub.s32 5, %v1090
        %v1092 = vrot.slane %v798, %v1091
        %v1093 = vmul.f32 %v1083, %v1092
        %v1094 = vmul.f32 %v1087, %v1092
        %v1095 = vmul.f32 %v1078, %v1050
        %v1096 = vmul.f32 %v1080, %v1051
        %v1097 = vadd.f32 %v1095, %v1093
        %v1098 = vadd.f32 %v1096, %v1094
        %1099 = vset.pattern.permute.xlu0 5
        %1100 = vperm.xlu0 %1099, %v818
        %v1101 = vpop.permute.xlu0 %1100
        %1103 = vset.pattern.permute.xlu0 5
        %1104 = vperm.xlu0 %1103, %v819
        %v1105 = vpop.permute.xlu0 %1104
        %v1107 = vmul.f32 %v1101, %v1097
        %v1108 = vmul.f32 %v1105, %v1098
        %v1109 = vsel %vm587, %v1107, 0.0
        %v1110 = vsel %vm587, %v1108, 0.0
        %v1111 = vadd.f32 %v1109, %v1110
        %v1112 = vrot.slane %v1111, 4
        %v1113 = vadd.f32 %v1111, %v1112
        %v1114 = vrot.slane %v1113, 2
        %v1115 = vadd.f32 %v1113, %v1114
        %v1116 = vrot.slane %v1115, 1
        %v1117 = vadd.f32 %v1115, %v1116
        %v1118 = vlaneseq
        %v1119 = vshrl.u32 %v1118, 7
        %v1120 = vsub.s32 6, %v1119
        %v1121 = vrot.slane %v795, %v1120
        %v1122 = vmul.f32 %v1121, %v791
        %v1123 = vmul.f32 %v1121, %v792
        %v1124 = vmul.f32 %v1122, 1.442695
        %v1125 = vpow.pop %v1124
        %v1126 = vmul.f32 %v1123, 1.442695
        %v1127 = vpow.pop %v1126
        %1128 = vset.pattern.permute.xlu0 6
        %1129 = vperm.xlu0 %1128, %v816
        %v1130 = vpop.permute.xlu0 %1129
        %1132 = vset.pattern.permute.xlu0 6
        %1133 = vperm.xlu0 %1132, %v817
        %v1134 = vpop.permute.xlu0 %1133
        %v1136 = vlaneseq
        %v1137 = vshrl.u32 %v1136, 7
        %v1138 = vsub.s32 6, %v1137
        %v1139 = vrot.slane %v798, %v1138
        %v1140 = vmul.f32 %v1130, %v1139
        %v1141 = vmul.f32 %v1134, %v1139
        %v1142 = vmul.f32 %v1125, %v1097
        %v1143 = vmul.f32 %v1127, %v1098
        %v1144 = vadd.f32 %v1142, %v1140
        %v1145 = vadd.f32 %v1143, %v1141
        %1146 = vset.pattern.permute.xlu0 6
        %1147 = vperm.xlu0 %1146, %v818
        %v1148 = vpop.permute.xlu0 %1147
        %1150 = vset.pattern.permute.xlu0 6
        %1151 = vperm.xlu0 %1150, %v819
        %v1152 = vpop.permute.xlu0 %1151
        %v1154 = vmul.f32 %v1148, %v1144
        %v1155 = vmul.f32 %v1152, %v1145
        %v1156 = vsel %vm587, %v1154, 0.0
        %v1157 = vsel %vm587, %v1155, 0.0
        %v1158 = vadd.f32 %v1156, %v1157
        %v1159 = vrot.slane %v1158, 4
        %v1160 = vadd.f32 %v1158, %v1159
        %v1161 = vrot.slane %v1160, 2
        %v1162 = vadd.f32 %v1160, %v1161
        %v1163 = vrot.slane %v1162, 1
        %v1164 = vadd.f32 %v1162, %v1163
        %v1165 = vlaneseq
        %v1166 = vshrl.u32 %v1165, 7
        %v1167 = vsub.s32 7, %v1166
        %v1168 = vrot.slane %v795, %v1167
        %v1169 = vmul.f32 %v1168, %v791
        %v1170 = vmul.f32 %v1168, %v792
        %v1171 = vmul.f32 %v1169, 1.442695
        %v1172 = vpow.pop %v1171
        %v1173 = vmul.f32 %v1170, 1.442695
        %v1174 = vpow.pop %v1173
        %1175 = vset.pattern.permute.xlu0 7
        %1176 = vperm.xlu0 %1175, %v816
        %v1177 = vpop.permute.xlu0 %1176
        %1179 = vset.pattern.permute.xlu0 7
        %1180 = vperm.xlu0 %1179, %v817
        %v1181 = vpop.permute.xlu0 %1180
        %v1183 = vlaneseq
        %v1184 = vshrl.u32 %v1183, 7
        %v1185 = vsub.s32 7, %v1184
        %v1186 = vrot.slane %v798, %v1185
        %v1187 = vmul.f32 %v1177, %v1186
        %v1188 = vmul.f32 %v1181, %v1186
        %v1189 = vmul.f32 %v1172, %v1144
        %v1190 = vmul.f32 %v1174, %v1145
        %v1191 = vadd.f32 %v1189, %v1187
        %v1192 = vadd.f32 %v1190, %v1188
        %1193 = vset.pattern.permute.xlu0 7
        %1194 = vperm.xlu0 %1193, %v818
        %v1195 = vpop.permute.xlu0 %1194
        %1197 = vset.pattern.permute.xlu0 7
        %1198 = vperm.xlu0 %1197, %v819
        %v1199 = vpop.permute.xlu0 %1198
        %v1201 = vmul.f32 %v1195, %v1191
        %v1202 = vmul.f32 %v1199, %v1192
        %v1203 = vsel %vm587, %v1201, 0.0
        %v1204 = vsel %vm587, %v1202, 0.0
        %v1205 = vadd.f32 %v1203, %v1204
        %v1206 = vrot.slane %v1205, 4
        %v1207 = vadd.f32 %v1205, %v1206
        %v1208 = vrot.slane %v1207, 2
        %v1209 = vadd.f32 %v1207, %v1208
        %v1210 = vrot.slane %v1209, 1
        %v1211 = vadd.f32 %v1209, %v1210
        %v1212 = vsel %vm726, %v882, %v929
        %vm1213 = vcmask 1041408
        %v1214 = vsel %vm1213, %v1212, %v976
        %vm1215 = vcmask 1042432
        %v1216 = vsel %vm1215, %v1214, %v1023
        %vm1217 = vcmask 1043456
        %v1218 = vsel %vm1217, %v1216, %v1070
        %vm1219 = vcmask 1044480
        %v1220 = vsel %vm1219, %v1218, %v1117
        %vm1221 = vcmask 1045504
        %v1222 = vsel %vm1221, %v1220, %v1164
        %vm1223 = vcmask 1046528
        %v1224 = vsel %vm1223, %v1222, %v1211
        %1225 = vst.msk [vmem:[#allocation4] sm:$0xff] %vm587, %v1224
        %1226 = vst.msk [vmem:[#allocation3] sm:$0xff] %vm587, %v1191
        %1227 = vst.msk [vmem:[#allocation3 + $0x8] sm:$0xff] %vm587, %v1192
        %v1228 = vld [vmem:[#allocation4] sm:$0xff]
        %v1229 = vld [vmem:[#allocation2 + $0x8] sm:$0xff]
        %v1230 = vld [vmem:[%s10] sm:$0x1]
        %v1232 = vlaneseq
        %v1233 = vshrl.u32 %v1232, 7
        %v1234 = vsub.s32 0, %v1233
        %v1235 = vrot.slane %v1230, %v1234
        %v1237 = vmul.f32 %v1229, %v1235
        %v1238 = vadd.f32 %v1228, %v1237
        %v1239 = vld [vmem:[#allocation9] sm:$0xf]
        %v1240 = vld [vmem:[#allocation9 + $0x4] sm:$0xf]
        %v1241 = vld [vmem:[#allocation9 + $0x8] sm:$0xf]
        %v1242 = vld [vmem:[#allocation9 + $0xc] sm:$0xf]
        %v1247 = vunpack.c.l.b16 %v1239
        %v1248 = vunpack.c.l.b16 %v1240
        %v1249 = vunpack.c.l.b16 %v1241
        %v1250 = vunpack.c.l.b16 %v1242
        %v1251 = vpack.c.b16 %v1248, %v1247
        %v1252 = vpack.c.b16 %v1250, %v1249
        %1255 = vmatprep.subr.bf16.mxu0 0
        %1256 = vmatpush1.bf16.msra.mxu0 %v1251
        %1257 = vmatprep.subr.bf16.mxu0 0
        %1258 = vmatpush1.bf16.msra.mxu0 %v1252
        %1259 = vmatprep.subr.bf16.mxu0 0
        %1260 = vmatpush1.bf16.msra.mxu0 0
        %1261 = vmatprep.subr.bf16.mxu0 0
        %1262 = vmatpush1.bf16.msra.mxu0 0
        %1263 = vmatprep.subr.bf16.mxu0 0
        %1264 = vmatpush1.bf16.msra.mxu0 0
        %1265 = vmatprep.subr.bf16.mxu0 0
        %1266 = vmatpush1.bf16.msra.mxu0 0
        %1267 = vmatprep.subr.bf16.mxu0 0
        %1268 = vmatpush1.bf16.msra.mxu0 0
        %1269 = vmatprep.subr.bf16.mxu0 0
        %1270 = vmatpush1.bf16.msra.mxu0 0
        %1271 = vmatprep.subr.bf16.mxu0 0
        %1272 = vmatpush1.bf16.msra.mxu0 0
        %1273 = vmatprep.subr.bf16.mxu0 0
        %1274 = vmatpush1.bf16.msra.mxu0 0
        %1275 = vmatprep.subr.bf16.mxu0 0
        %1276 = vmatpush1.bf16.msra.mxu0 0
        %1277 = vmatprep.subr.bf16.mxu0 0
        %1278 = vmatpush1.bf16.msra.mxu0 0
        %1279 = vmatprep.subr.bf16.mxu0 0
        %1280 = vmatpush1.bf16.msra.mxu0 0
        %1281 = vmatprep.subr.bf16.mxu0 0
        %1282 = vmatpush1.bf16.msra.mxu0 0
        %1283 = vmatprep.subr.bf16.mxu0 0
        %1284 = vmatpush1.bf16.msra.mxu0 0
        %1285 = vmatprep.subr.bf16.mxu0 0
        %1286 = vmatpush1.bf16.msra.mxu0 0
        %1287 = vmatprep.mubr.bf16.mxu0 0
        %1288 = vmatmul.mubr.bf16.gmra.mrb[0].mxu0 %v545
        %v1289 = vpop.f32.mrb[0].mxu0
        %v1290 = vadd.f32 0.0, %v1289
        %v1291 = vpop.f32.mrb[0].mxu0
        %v1292 = vpop.f32.mrb[0].mxu0
        %v1293 = vpop.f32.mrb[0].mxu0
        %1294 = vdwg.mxu0
        %v1295 = vsub.f32 0.0, %v1290
        %v1296 = vmul.f32 %v1295, 1.442695
        %v1297 = vpow.pop %v1296
        %v1298 = vadd.f32 %v1297, 1.0
        %v1299 = vrcp.pop %v1298
        %v1300 = vmul.f32 1.0, %v1299
        %v1301 = vmul.f32 %v1290, %v1300
        %v1302 = vmul.f32 %v1238, %v1301
        %v1303 = vpack.c.bf16 %v1302, %v1302
        %v1304 = vld [vmem:[%s11] sm:$0xf]
        %v1305 = vld [vmem:[%s11 + $0x4] sm:$0xf]
        %v1306 = vld [vmem:[%s11 + $0x8] sm:$0xf]
        %v1307 = vld [vmem:[%s11 + $0xc] sm:$0xf]
        %v1308 = vld [vmem:[%s11 + $0x10] sm:$0xf]
        %v1309 = vld [vmem:[%s11 + $0x14] sm:$0xf]
        %v1310 = vld [vmem:[%s11 + $0x18] sm:$0xf]
        %v1311 = vld [vmem:[%s11 + $0x1c] sm:$0xf]
        %v1312 = vld [vmem:[%s441] sm:$0xf]
        %v1313 = vunpack.c.l.bf16 %v1312
        %v1322 = vunpack.c.l.b16 %v1304
        %v1323 = vunpack.c.l.b16 %v1305
        %v1324 = vunpack.c.l.b16 %v1306
        %v1325 = vunpack.c.l.b16 %v1307
        %v1326 = vunpack.c.l.b16 %v1308
        %v1327 = vunpack.c.l.b16 %v1309
        %v1328 = vunpack.c.l.b16 %v1310
        %v1329 = vunpack.c.l.b16 %v1311
        %v1330 = vpack.c.b16 %v1323, %v1322
        %v1331 = vpack.c.b16 %v1325, %v1324
        %v1332 = vpack.c.b16 %v1327, %v1326
        %v1333 = vpack.c.b16 %v1329, %v1328
        %v1339 = vsel %vm587, %v1303, 0
        %1341 = vmatprep.subr.bf16.mxu0 0
        %1342 = vmatpush1.bf16.msra.mxu0 %v1330
        %1343 = vmatprep.subr.bf16.mxu0 0
        %1344 = vmatpush1.bf16.msra.mxu0 %v1331
        %1345 = vmatprep.subr.bf16.mxu0 0
        %1346 = vmatpush1.bf16.msra.mxu0 %v1332
        %1347 = vmatprep.subr.bf16.mxu0 0
        %1348 = vmatpush1.bf16.msra.mxu0 %v1333
        %1349 = vmatprep.subr.bf16.mxu0 0
        %1350 = vmatpush1.bf16.msra.mxu0 0
        %1351 = vmatprep.subr.bf16.mxu0 0
        %1352 = vmatpush1.bf16.msra.mxu0 0
        %1353 = vmatprep.subr.bf16.mxu0 0
        %1354 = vmatpush1.bf16.msra.mxu0 0
        %1355 = vmatprep.subr.bf16.mxu0 0
        %1356 = vmatpush1.bf16.msra.mxu0 0
        %1357 = vmatprep.subr.bf16.mxu0 0
        %1358 = vmatpush1.bf16.msra.mxu0 0
        %1359 = vmatprep.subr.bf16.mxu0 0
        %1360 = vmatpush1.bf16.msra.mxu0 0
        %1361 = vmatprep.subr.bf16.mxu0 0
        %1362 = vmatpush1.bf16.msra.mxu0 0
        %1363 = vmatprep.subr.bf16.mxu0 0
        %1364 = vmatpush1.bf16.msra.mxu0 0
        %1365 = vmatprep.subr.bf16.mxu0 0
        %1366 = vmatpush1.bf16.msra.mxu0 0
        %1367 = vmatprep.subr.bf16.mxu0 0
        %1368 = vmatpush1.bf16.msra.mxu0 0
        %1369 = vmatprep.subr.bf16.mxu0 0
        %1370 = vmatpush1.bf16.msra.mxu0 0
        %1371 = vmatprep.subr.bf16.mxu0 0
        %1372 = vmatpush1.bf16.msra.mxu0 0
        %1373 = vmatprep.mubr.bf16.mxu0 0
        %1374 = vmatmul.mubr.bf16.gmra.mrb[0].mxu0 %v1339
        %v1375 = vpop.f32.mrb[0].mxu0
        %v1376 = vadd.f32 %v1313, %v1375
        %v1377 = vpop.f32.mrb[0].mxu0
        %v1378 = vpop.f32.mrb[0].mxu0
        %v1379 = vpop.f32.mrb[0].mxu0
        %1380 = vdwg.mxu0
        %v1381 = vpack.c.bf16 %v1376, %v1376
        %vm1382 = vcmask 257024
        %1383 = vst.msk [vmem:[%s497] sm:$0xf] %vm1382, %v1381
        %s1384 = sand.u32 %s312, 1
        %s1385 = scalar_lea.sflag [#allocation8], %s1384
        %s1386 = sand.u32 %s312, 1
        %s1387 = smul.addr %s1386, 4
        %s1388 = scalar_lea.vmem [#allocation15], %s1387
        // Predicated region
        $region93: #{tpu_custom_call.1} parent=67 // pred_check
          %p1389 = pneg %p322
        $region94: #{tpu_custom_call.1} parent=67 // pred_check_branch
          %1391 = sbr.rel (%p1389) target = $region96
        $region95: #{tpu_custom_call.1} parent=67 // pred_region
          %s1393 = ssub.s32 64, 64
          %1394 = vsyncadd %s1385, %s1393
          %s1395 = sadd.s32 %s36, %s35
          %s1396 = smul.addr %s1395, 64
          %s1397 = scalar_lea.hbm %s12, %s1396
          %s1399 = sshll.u32 %s1388, 4
          %s1400 = int_to_ptr.vmem [resolvable:$true] %s1399
          %1402 = dma.vmem_to_hbm [thread:$0]  %s1400, 64, %s1397, %s1385
        $region96: #{tpu_custom_call.1} parent=67 // pred_fallthru
          _
      $region68: #{tpu_custom_call.1} parent=5 // pred_fallthru
        _
      %p1403 = scmp.le.s32.totalorder 2, %s26
      // Predicated region
      $region97: #{tpu_custom_call.1} parent=5 // pred_check
        %p1404 = pneg %p1403
      $region98: #{tpu_custom_call.1} parent=5 // pred_check_branch
        %1406 = sbr.rel (%p1404) target = $region100
      $region99: #{tpu_custom_call.1} parent=5 // pred_region
        %s1407 = ssub.s32 %s26, 2
        // Predicated region
        $region101: #{tpu_custom_call.1} parent=99 // pred_check
          %p1408 = pneg %p328
        $region102: #{tpu_custom_call.1} parent=99 // pred_check_branch
          %1410 = sbr.rel (%p1408) target = $region104
        $region103: #{tpu_custom_call.1} parent=99 // pred_region
          %s1411 = sand.u32 %s313, 1
          %s1412 = scalar_lea.sflag [#allocation8], %s1411
          %s1413 = sand.u32 %s313, 1
          %s1414 = smul.addr %s1413, 4
          %s1415 = scalar_lea.vmem [#allocation15], %s1414
          %1416 = dma.done %s1412, 64
        $region104: #{tpu_custom_call.1} parent=99 // pred_fallthru
          _
      $region100: #{tpu_custom_call.1} parent=5 // pred_fallthru
        _
    $region6: #{tpu_custom_call.1} parent=1 // loop_footer
      %s30 = sadd.s32 1, %s26
    $region7: #{tpu_custom_call.1} parent=1 // loop_footer_branch
      %25 = sbr.rel target = $region3
    $region8: #{tpu_custom_call.1} parent=1 // loop_exit
      _
    %1417 = vsyncpa [#allocation7], 1
    %s1418 = scalar_lea.sflag [#allocation7], 1
    %1419 = vsyncpa %s1418, 1
    %1420 = vsyncpa [#allocation10], 1
    %1421 = vsyncpa [#allocation13], 1
    %1422 = vsyncpa [#allocation8], 1
    %s1423 = scalar_lea.sflag [#allocation8], 1
    %1424 = vsyncpa %s1423, 1

</llo_original>
